<compile_context>
chip_gen: v7x
topology: tpu7x:2x2x1
jax: 0.10.0
libtpu: 0.0.40
codegen_flags: <defaults>
</compile_context>

<pallas_src>
from functools import partial

import jax
import jax.numpy as jnp
from jax.experimental import pallas as pl
from jax.experimental.pallas import tpu as pltpu

NUM_HEADS = 4
LN_EPS = 1e-5          # nn.LayerNorm default eps
NEG_BIG = -1e30        # finite stand-in for -inf key-padding bias


# ---------------- fused kernel: BB batch elements per grid step ----------------
def _cross_attn_ln_kernel(x_ref, ctx_ref, bias_ref,
                          wq_ref, wkv_ref, bkv_ref, wo_ref, consts_ref, o_ref):
    BB, T, E = x_ref.shape
    S = ctx_ref.shape[1]
    H = NUM_HEADS
    D = E // H

    # Packed per-row constants: [bq (pre-scaled), bo, gamma, beta], each (1, E).
    bq = consts_ref[0:1, :]
    bo = consts_ref[1:2, :]
    gamma = consts_ref[2:3, :]
    beta = consts_ref[3:4, :]

    # Flatten batch into the matmul M dimension (lane dim unchanged -> free).
    xf = x_ref[...].reshape(BB * T, E)            # (BB*T, E)
    ctxf = ctx_ref[...].reshape(BB * S, E)        # (BB*S, E)

    # Projections: Q (already scaled by 1/sqrt(D) via folded weights), fused K|V.
    q = jnp.dot(xf, wq_ref[...], preferred_element_type=jnp.float32) + bq
    kv = jnp.dot(ctxf, wkv_ref[...], preferred_element_type=jnp.float32) + bkv_ref[...]
    k = kv[:, :E]                                 # (BB*S, E)  tile-aligned slice
    v = kv[:, E:]                                 # (BB*S, E)

    # Per-(batch, head) scores, stacked so masking + softmax run ONCE.
    scores = []
    for b in range(BB):                           # static unroll (tiny BB)
        qb = q[b * T:(b + 1) * T, :]              # (T, E)
        kb = k[b * S:(b + 1) * S, :]              # (S, E)
        for h in range(H):                        # static unroll
            lo = h * D
            s_bh = jax.lax.dot_general(qb[:, lo:lo + D], kb[:, lo:lo + D],
                                       (((1,), (1,)), ((), ())),
                                       preferred_element_type=jnp.float32)  # (T, S)
            scores.append(s_bh)
    s_all = jnp.concatenate(scores, axis=0).reshape(BB, H * T, S)
    s_all = s_all + bias_ref[...]                 # additive key-padding bias, once

    # Single softmax pass over S for all BB*H*T rows.
    m = jnp.max(s_all, axis=-1, keepdims=True)
    p = jnp.exp(s_all - m)
    p = p / jnp.sum(p, axis=-1, keepdims=True)    # (BB, H*T, S)
    # TODO(synk): a fully-padded context row yields a uniform softmax here rather
    # than the NaNs PyTorch produces for an all-True key_padding_mask.

    # P @ V per (batch, head), assembled into one (BB*T, E) tensor so the output
    # projection is a single K=128 matmul.
    outs = []
    for b in range(BB):
        vb = v[b * S:(b + 1) * S, :]              # (S, E)
        pb = p[b]                                 # (H*T, S)
        heads = []
        for h in range(H):
            p_bh = pb[h * T:(h + 1) * T, :]       # (T, S)
            oh = jnp.dot(p_bh, vb[:, h * D:(h + 1) * D],
                         preferred_element_type=jnp.float32)   # (T, D)
            heads.append(oh)
        outs.append(jnp.concatenate(heads, axis=1))             # (T, E)
    attn = jnp.concatenate(outs, axis=0)                         # (BB*T, E)

    # Output projection + residual, then LayerNorm over the embedding dim.
    y = xf + jnp.dot(attn, wo_ref[...], preferred_element_type=jnp.float32) + bo
    mu = jnp.mean(y, axis=-1, keepdims=True)
    c = y - mu
    var = jnp.mean(c * c, axis=-1, keepdims=True)
    out = (c * jax.lax.rsqrt(var + LN_EPS)) * gamma + beta
    o_ref[...] = out.reshape(BB, T, E)


# ---------------- one-time parameter layout prep (hoisted out of hot path) -----
def prepare_params(params, num_heads=NUM_HEADS):
    """torch layout -> TPU layout: transpose to (in, out), fuse K/V, fold the
    1/sqrt(head_dim) scale into Wq/bq, pack (bq, bo, gamma, beta) into (4, E)."""
    E = params["out_w"].shape[0]
    D = E // num_heads
    scale = 1.0 / (D ** 0.5)
    in_w, in_b = params["in_w"], params["in_b"]
    wq_t = jnp.transpose(in_w[:E]) * scale                               # (E, E)
    wkv_t = jnp.concatenate([jnp.transpose(in_w[E:2 * E]),
                             jnp.transpose(in_w[2 * E:])], axis=1)       # (E, 2E)
    bkv = in_b[E:].reshape(1, 2 * E)
    consts = jnp.stack([in_b[:E] * scale,                                # bq * scale
                        params["out_b"],                                 # bo
                        params["ln_g"],                                  # gamma
                        params["ln_b"]], axis=0)                         # (4, E)
    wo_t = jnp.transpose(params["out_w"])                                # (E, E)
    return (wq_t, wkv_t, bkv, wo_t, consts)


# ---------------- public forward ------------------------------------------------
@partial(jax.jit, static_argnames=("batch_blocks",))
def cross_attention_block(x, context, context_mask, prepared, batch_blocks=1):
    """batch_blocks=1: whole batch per step (v5e/v6e). batch_blocks=2 on v7x so
    both TensorCores pick up work (requires B % batch_blocks == 0)."""
    B, T, E = x.shape
    S = context.shape[1]
    H, D = NUM_HEADS, E // NUM_HEADS
    assert B % batch_blocks == 0
    BB = B // batch_blocks
    wq_t, wkv_t, bkv, wo_t, consts = prepared

    # Precompute the additive key-padding bias (0 for real tokens, NEG_BIG for pad).
    if context_mask is None:
        bias = jnp.zeros((B, 1, S), jnp.float32)
    else:
        bias = jnp.where(context_mask == 0, NEG_BIG, 0.0).astype(jnp.float32)
        bias = bias.reshape(B, 1, S)

    flops = 2 * B * (T * E * E          # Q projection
                     + S * E * 2 * E    # fused K|V projection
                     + 2 * H * T * S * D  # QK^T and P@V
                     + T * E * E)       # output projection
    bytes_accessed = 4 * (x.size + context.size + bias.size + wq_t.size
                          + wkv_t.size + bkv.size + wo_t.size + consts.size
                          + x.size)
    cost = pl.CostEstimate(flops=flops, transcendentals=B * H * T * S,
                           bytes_accessed=bytes_accessed)

    return pl.pallas_call(
        _cross_attn_ln_kernel,
        out_shape=jax.ShapeDtypeStruct((B, T, E), jnp.float32),
        grid=(batch_blocks,),
        in_specs=[
            pl.BlockSpec((BB, T, E), lambda i: (i, 0, 0)),     # x
            pl.BlockSpec((BB, S, E), lambda i: (i, 0, 0)),     # context
            pl.BlockSpec((BB, 1, S), lambda i: (i, 0, 0)),     # additive mask bias
            pl.BlockSpec((E, E), lambda i: (0, 0)),            # Wq^T * scale
            pl.BlockSpec((E, 2 * E), lambda i: (0, 0)),        # [Wk^T | Wv^T]
            pl.BlockSpec((1, 2 * E), lambda i: (0, 0)),        # [bk | bv]
            pl.BlockSpec((E, E), lambda i: (0, 0)),            # Wo^T
            pl.BlockSpec((4, E), lambda i: (0, 0)),            # [bq*scale, bo, g, b]
        ],
        out_specs=pl.BlockSpec((BB, T, E), lambda i: (i, 0, 0)),
        compiler_params=pltpu.CompilerParams(
            dimension_semantics=("parallel",)),
        cost_estimate=cost,
    )(x, context, bias, wq_t, wkv_t, bkv, wo_t, consts)


# ---------------- pure-JAX reference (PyTorch semantics) for self-check --------
def reference_forward(x, context, context_mask, params):
    E = params["out_w"].shape[0]
    H, D = NUM_HEADS, E // NUM_HEADS
    B, T, _ = x.shape
    S = context.shape[1]
    wq, wk, wv = params["in_w"][:E], params["in_w"][E:2 * E], params["in_w"][2 * E:]
    bq, bk, bv = params["in_b"][:E], params["in_b"][E:2 * E], params["in_b"][2 * E:]
    q = (x @ wq.T + bq).reshape(B, T, H, D).transpose(0, 2, 1, 3)
    k = (context @ wk.T + bk).reshape(B, S, H, D).transpose(0, 2, 1, 3)
    v = (context @ wv.T + bv).reshape(B, S, H, D).transpose(0, 2, 1, 3)
    scores = jnp.einsum("bhtd,bhsd->bhts", q, k) / jnp.sqrt(jnp.float32(D))
    bias = jnp.where(context_mask == 0, -jnp.inf, 0.0)[:, None, None, :]
    p = jax.nn.softmax(scores + bias, axis=-1)
    o = jnp.einsum("bhts,bhsd->bhtd", p, v).transpose(0, 2, 1, 3).reshape(B, T, E)
    attn_out = o @ params["out_w"].T + params["out_b"]
    y = x + attn_out
    mu = jnp.mean(y, axis=-1, keepdims=True)
    var = jnp.mean((y - mu) ** 2, axis=-1, keepdims=True)
    return (y - mu) / jnp.sqrt(var + LN_EPS) * params["ln_g"] + params["ln_b"]


# ---------------- main -----------------------------------------------------------
if __name__ == "__main__":
    B, T, S, E = 2, 8, 16, 128        # batch, tgt_len, ctx_len, embed_dim (4 heads)
    key = jax.random.PRNGKey(0)
    key, k1, k2, k3, k4, k5, k6 = jax.random.split(key, 7)

    w_scale = 1.0 / (E ** 0.5)
    params = {
        "in_w": jax.random.normal(k1, (3 * E, E), jnp.float32) * w_scale,
        "in_b": jax.random.normal(k2, (3 * E,), jnp.float32) * 0.02,
        "out_w": jax.random.normal(k3, (E, E), jnp.float32) * w_scale,
        "out_b": jax.random.normal(k4, (E,), jnp.float32) * 0.02,
        "ln_g": jnp.ones((E,), jnp.float32)
                + 0.1 * jax.random.normal(k5, (E,), jnp.float32),
        "ln_b": 0.1 * jax.random.normal(k6, (E,), jnp.float32),
    }

    key, kx, kc = jax.random.split(key, 3)
    x = jax.random.normal(kx, (B, T, E), jnp.float32)
    context = jax.random.normal(kc, (B, S, E), jnp.float32)
    lengths = jnp.array([S, 11], dtype=jnp.int32)          # second item has padding
    context_mask = (jnp.arange(S)[None, :] < lengths[:, None]).astype(jnp.float32)

    prepared = prepare_params(params)
    # Whole batch in one grid step (best on v5e/v6e); use batch_blocks=2 on v7x.
    out = cross_attention_block(x, context, context_mask, prepared, batch_blocks=1)
    out = jax.block_until_ready(out)
    assert out.shape == (B, T, E) and out.dtype == jnp.float32

    ref = reference_forward(x, context, context_mask, params)
    # Tolerance covers default (bf16-pass) MXU precision vs the f32 reference.
    assert jnp.allclose(out, ref, rtol=2e-2, atol=2e-2), \
        float(jnp.max(jnp.abs(out - ref)))

    print("KERNEL_OK")
</pallas_src>

<mosaic_0001>
module attributes {stable_mosaic.version = 11 : i64} {
  func.func @_cross_attn_ln_kernel(%arg0: i32, %arg1: memref<2x8x128xf32, #tpu.memory_space<vmem>>, %arg2: memref<2x16x128xf32, #tpu.memory_space<vmem>>, %arg3: memref<2x1x16xf32, #tpu.memory_space<vmem>>, %arg4: memref<128x128xf32, #tpu.memory_space<vmem>>, %arg5: memref<128x256xf32, #tpu.memory_space<vmem>>, %arg6: memref<1x256xf32, #tpu.memory_space<vmem>>, %arg7: memref<128x128xf32, #tpu.memory_space<vmem>>, %arg8: memref<4x128xf32, #tpu.memory_space<vmem>>, %arg9: memref<2x8x128xf32, #tpu.memory_space<vmem>>) attributes {dimension_semantics = [#tpu.dimension_semantics<parallel>], iteration_bounds = array<i64: 1>, scalar_prefetch = 0 : i64, scratch_operands = 0 : i64, tpu.core_type = #tpu.core_type<tc>, window_params = [{transform_indices = @transform_0, window_bounds = array<i64: 2, 8, 128>}, {transform_indices = @transform_1, window_bounds = array<i64: 2, 16, 128>}, {transform_indices = @transform_2, window_bounds = array<i64: 2, 1, 16>}, {pipeline_mode = #tpu.pipeline_mode<synchronous>, transform_indices = @transform_3, window_bounds = array<i64: 128, 128>}, {pipeline_mode = #tpu.pipeline_mode<synchronous>, transform_indices = @transform_4, window_bounds = array<i64: 128, 256>}, {pipeline_mode = #tpu.pipeline_mode<synchronous>, transform_indices = @transform_5, window_bounds = array<i64: 1, 256>}, {pipeline_mode = #tpu.pipeline_mode<synchronous>, transform_indices = @transform_6, window_bounds = array<i64: 128, 128>}, {pipeline_mode = #tpu.pipeline_mode<synchronous>, transform_indices = @transform_7, window_bounds = array<i64: 4, 128>}, {transform_indices = @transform_8, window_bounds = array<i64: 2, 8, 128>}]} {
    %c0 = arith.constant 0 : index
    %c0_0 = arith.constant 0 : index
    %0 = vector.load %arg8[%c0, %c0_0] : memref<4x128xf32, #tpu.memory_space<vmem>>, vector<1x128xf32>
    %c1 = arith.constant 1 : index
    %c0_1 = arith.constant 0 : index
    %1 = vector.load %arg8[%c1, %c0_1] : memref<4x128xf32, #tpu.memory_space<vmem>>, vector<1x128xf32>
    %c2 = arith.constant 2 : index
    %c0_2 = arith.constant 0 : index
    %2 = vector.load %arg8[%c2, %c0_2] : memref<4x128xf32, #tpu.memory_space<vmem>>, vector<1x128xf32>
    %c3 = arith.constant 3 : index
    %c0_3 = arith.constant 0 : index
    %3 = vector.load %arg8[%c3, %c0_3] : memref<4x128xf32, #tpu.memory_space<vmem>>, vector<1x128xf32>
    %c0_4 = arith.constant 0 : index
    %c0_5 = arith.constant 0 : index
    %c0_6 = arith.constant 0 : index
    %4 = vector.load %arg1[%c0_4, %c0_5, %c0_6] : memref<2x8x128xf32, #tpu.memory_space<vmem>>, vector<2x8x128xf32>
    %5 = vector.shape_cast %4 : vector<2x8x128xf32> to vector<16x128xf32>
    %c0_7 = arith.constant 0 : index
    %c0_8 = arith.constant 0 : index
    %c0_9 = arith.constant 0 : index
    %6 = vector.load %arg2[%c0_7, %c0_8, %c0_9] : memref<2x16x128xf32, #tpu.memory_space<vmem>>, vector<2x16x128xf32>
    %7 = vector.shape_cast %6 : vector<2x16x128xf32> to vector<32x128xf32>
    %c0_10 = arith.constant 0 : index
    %c0_11 = arith.constant 0 : index
    %8 = vector.load %arg4[%c0_10, %c0_11] : memref<128x128xf32, #tpu.memory_space<vmem>>, vector<128x128xf32>
    %cst = arith.constant dense<0.000000e+00> : vector<16x128xf32>
    %9 = tpu.matmul %5, %8, %cst {dimension_numbers = #tpu.dot_dimension_numbers<[1], [0], [0], [1], [0, 0, 1, 1], [], []>} : vector<16x128xf32>, vector<128x128xf32>, vector<16x128xf32> -> vector<16x128xf32>
    %10 = vector.broadcast %0 : vector<1x128xf32> to vector<16x128xf32>
    %11 = arith.addf %9, %10 : vector<16x128xf32>
    %c0_12 = arith.constant 0 : index
    %c0_13 = arith.constant 0 : index
    %12 = vector.load %arg5[%c0_12, %c0_13] : memref<128x256xf32, #tpu.memory_space<vmem>>, vector<128x256xf32>
    %cst_14 = arith.constant dense<0.000000e+00> : vector<32x256xf32>
    %13 = tpu.matmul %7, %12, %cst_14 {dimension_numbers = #tpu.dot_dimension_numbers<[1], [0], [0], [1], [0, 0, 1, 1], [], []>} : vector<32x128xf32>, vector<128x256xf32>, vector<32x256xf32> -> vector<32x256xf32>
    %c0_15 = arith.constant 0 : index
    %c0_16 = arith.constant 0 : index
    %14 = vector.load %arg6[%c0_15, %c0_16] : memref<1x256xf32, #tpu.memory_space<vmem>>, vector<1x256xf32>
    %15 = vector.broadcast %14 : vector<1x256xf32> to vector<32x256xf32>
    %16 = arith.addf %13, %15 : vector<32x256xf32>
    %17 = vector.extract_strided_slice %16 {offsets = [0, 0], sizes = [32, 128], strides = [1, 1]} : vector<32x256xf32> to vector<32x128xf32>
    %18 = vector.extract_strided_slice %16 {offsets = [0, 128], sizes = [32, 128], strides = [1, 1]} : vector<32x256xf32> to vector<32x128xf32>
    %19 = vector.extract_strided_slice %11 {offsets = [0, 0], sizes = [8, 128], strides = [1, 1]} : vector<16x128xf32> to vector<8x128xf32>
    %20 = vector.extract_strided_slice %17 {offsets = [0, 0], sizes = [16, 128], strides = [1, 1]} : vector<32x128xf32> to vector<16x128xf32>
    %21 = vector.extract_strided_slice %19 {offsets = [0, 0], sizes = [8, 32], strides = [1, 1]} : vector<8x128xf32> to vector<8x32xf32>
    %22 = vector.extract_strided_slice %20 {offsets = [0, 0], sizes = [16, 32], strides = [1, 1]} : vector<16x128xf32> to vector<16x32xf32>
    %cst_17 = arith.constant dense<0.000000e+00> : vector<8x16xf32>
    %23 = tpu.matmul %21, %22, %cst_17 {dimension_numbers = #tpu.dot_dimension_numbers<[1], [1], [0], [0], [0, 0, 1, 0], [], []>} : vector<8x32xf32>, vector<16x32xf32>, vector<8x16xf32> -> vector<8x16xf32>
    %24 = vector.extract_strided_slice %19 {offsets = [0, 32], sizes = [8, 32], strides = [1, 1]} : vector<8x128xf32> to vector<8x32xf32>
    %25 = vector.extract_strided_slice %20 {offsets = [0, 32], sizes = [16, 32], strides = [1, 1]} : vector<16x128xf32> to vector<16x32xf32>
    %cst_18 = arith.constant dense<0.000000e+00> : vector<8x16xf32>
    %26 = tpu.matmul %24, %25, %cst_18 {dimension_numbers = #tpu.dot_dimension_numbers<[1], [1], [0], [0], [0, 0, 1, 0], [], []>} : vector<8x32xf32>, vector<16x32xf32>, vector<8x16xf32> -> vector<8x16xf32>
    %27 = vector.extract_strided_slice %19 {offsets = [0, 64], sizes = [8, 32], strides = [1, 1]} : vector<8x128xf32> to vector<8x32xf32>
    %28 = vector.extract_strided_slice %20 {offsets = [0, 64], sizes = [16, 32], strides = [1, 1]} : vector<16x128xf32> to vector<16x32xf32>
    %cst_19 = arith.constant dense<0.000000e+00> : vector<8x16xf32>
    %29 = tpu.matmul %27, %28, %cst_19 {dimension_numbers = #tpu.dot_dimension_numbers<[1], [1], [0], [0], [0, 0, 1, 0], [], []>} : vector<8x32xf32>, vector<16x32xf32>, vector<8x16xf32> -> vector<8x16xf32>
    %30 = vector.extract_strided_slice %19 {offsets = [0, 96], sizes = [8, 32], strides = [1, 1]} : vector<8x128xf32> to vector<8x32xf32>
    %31 = vector.extract_strided_slice %20 {offsets = [0, 96], sizes = [16, 32], strides = [1, 1]} : vector<16x128xf32> to vector<16x32xf32>
    %cst_20 = arith.constant dense<0.000000e+00> : vector<8x16xf32>
    %32 = tpu.matmul %30, %31, %cst_20 {dimension_numbers = #tpu.dot_dimension_numbers<[1], [1], [0], [0], [0, 0, 1, 0], [], []>} : vector<8x32xf32>, vector<16x32xf32>, vector<8x16xf32> -> vector<8x16xf32>
    %33 = vector.extract_strided_slice %11 {offsets = [8, 0], sizes = [8, 128], strides = [1, 1]} : vector<16x128xf32> to vector<8x128xf32>
    %34 = vector.extract_strided_slice %17 {offsets = [16, 0], sizes = [16, 128], strides = [1, 1]} : vector<32x128xf32> to vector<16x128xf32>
    %35 = vector.extract_strided_slice %33 {offsets = [0, 0], sizes = [8, 32], strides = [1, 1]} : vector<8x128xf32> to vector<8x32xf32>
    %36 = vector.extract_strided_slice %34 {offsets = [0, 0], sizes = [16, 32], strides = [1, 1]} : vector<16x128xf32> to vector<16x32xf32>
    %cst_21 = arith.constant dense<0.000000e+00> : vector<8x16xf32>
    %37 = tpu.matmul %35, %36, %cst_21 {dimension_numbers = #tpu.dot_dimension_numbers<[1], [1], [0], [0], [0, 0, 1, 0], [], []>} : vector<8x32xf32>, vector<16x32xf32>, vector<8x16xf32> -> vector<8x16xf32>
    %38 = vector.extract_strided_slice %33 {offsets = [0, 32], sizes = [8, 32], strides = [1, 1]} : vector<8x128xf32> to vector<8x32xf32>
    %39 = vector.extract_strided_slice %34 {offsets = [0, 32], sizes = [16, 32], strides = [1, 1]} : vector<16x128xf32> to vector<16x32xf32>
    %cst_22 = arith.constant dense<0.000000e+00> : vector<8x16xf32>
    %40 = tpu.matmul %38, %39, %cst_22 {dimension_numbers = #tpu.dot_dimension_numbers<[1], [1], [0], [0], [0, 0, 1, 0], [], []>} : vector<8x32xf32>, vector<16x32xf32>, vector<8x16xf32> -> vector<8x16xf32>
    %41 = vector.extract_strided_slice %33 {offsets = [0, 64], sizes = [8, 32], strides = [1, 1]} : vector<8x128xf32> to vector<8x32xf32>
    %42 = vector.extract_strided_slice %34 {offsets = [0, 64], sizes = [16, 32], strides = [1, 1]} : vector<16x128xf32> to vector<16x32xf32>
    %cst_23 = arith.constant dense<0.000000e+00> : vector<8x16xf32>
    %43 = tpu.matmul %41, %42, %cst_23 {dimension_numbers = #tpu.dot_dimension_numbers<[1], [1], [0], [0], [0, 0, 1, 0], [], []>} : vector<8x32xf32>, vector<16x32xf32>, vector<8x16xf32> -> vector<8x16xf32>
    %44 = vector.extract_strided_slice %33 {offsets = [0, 96], sizes = [8, 32], strides = [1, 1]} : vector<8x128xf32> to vector<8x32xf32>
    %45 = vector.extract_strided_slice %34 {offsets = [0, 96], sizes = [16, 32], strides = [1, 1]} : vector<16x128xf32> to vector<16x32xf32>
    %cst_24 = arith.constant dense<0.000000e+00> : vector<8x16xf32>
    %46 = tpu.matmul %44, %45, %cst_24 {dimension_numbers = #tpu.dot_dimension_numbers<[1], [1], [0], [0], [0, 0, 1, 0], [], []>} : vector<8x32xf32>, vector<16x32xf32>, vector<8x16xf32> -> vector<8x16xf32>
    %47 = tpu.concatenate %23, %26, %29, %32, %37, %40, %43, %46 in 0 : vector<8x16xf32>, vector<8x16xf32>, vector<8x16xf32>, vector<8x16xf32>, vector<8x16xf32>, vector<8x16xf32>, vector<8x16xf32>, vector<8x16xf32> -> vector<64x16xf32>
    %48 = vector.shape_cast %47 : vector<64x16xf32> to vector<2x32x16xf32>
    %c0_25 = arith.constant 0 : index
    %c0_26 = arith.constant 0 : index
    %c0_27 = arith.constant 0 : index
    %49 = vector.load %arg3[%c0_25, %c0_26, %c0_27] : memref<2x1x16xf32, #tpu.memory_space<vmem>>, vector<2x1x16xf32>
    %50 = vector.broadcast %49 : vector<2x1x16xf32> to vector<2x32x16xf32>
    %51 = arith.addf %48, %50 : vector<2x32x16xf32>
    %cst_28 = arith.constant dense<0xFF800000> : vector<2x32xf32>
    %52 = vector.multi_reduction <maximumf>, %51, %cst_28 [2] : vector<2x32x16xf32> to vector<2x32xf32>
    %53 = vector.shape_cast %52 : vector<2x32xf32> to vector<2x32x1xf32>
    %54 = vector.broadcast %53 : vector<2x32x1xf32> to vector<2x32x16xf32>
    %55 = arith.subf %51, %54 : vector<2x32x16xf32>
    %56 = math.exp %55 : vector<2x32x16xf32>
    %cst_29 = arith.constant dense<0.000000e+00> : vector<2x32xf32>
    %57 = vector.multi_reduction <add>, %56, %cst_29 [2] : vector<2x32x16xf32> to vector<2x32xf32>
    %58 = vector.shape_cast %57 : vector<2x32xf32> to vector<2x32x1xf32>
    %59 = vector.broadcast %58 : vector<2x32x1xf32> to vector<2x32x16xf32>
    %60 = arith.divf %56, %59 : vector<2x32x16xf32>
    %61 = vector.extract_strided_slice %18 {offsets = [0, 0], sizes = [16, 128], strides = [1, 1]} : vector<32x128xf32> to vector<16x128xf32>
    %62 = vector.extract_strided_slice %60 {offsets = [0, 0, 0], sizes = [1, 32, 16], strides = [1, 1, 1]} : vector<2x32x16xf32> to vector<1x32x16xf32>
    %63 = vector.shape_cast %62 : vector<1x32x16xf32> to vector<32x16xf32>
    %64 = vector.extract_strided_slice %63 {offsets = [0, 0], sizes = [8, 16], strides = [1, 1]} : vector<32x16xf32> to vector<8x16xf32>
    %65 = vector.extract_strided_slice %61 {offsets = [0, 0], sizes = [16, 32], strides = [1, 1]} : vector<16x128xf32> to vector<16x32xf32>
    %cst_30 = arith.constant dense<0.000000e+00> : vector<8x32xf32>
    %66 = tpu.matmul %64, %65, %cst_30 {dimension_numbers = #tpu.dot_dimension_numbers<[1], [0], [0], [1], [0, 0, 1, 1], [], []>} : vector<8x16xf32>, vector<16x32xf32>, vector<8x32xf32> -> vector<8x32xf32>
    %67 = vector.extract_strided_slice %63 {offsets = [8, 0], sizes = [8, 16], strides = [1, 1]} : vector<32x16xf32> to vector<8x16xf32>
    %68 = vector.extract_strided_slice %61 {offsets = [0, 32], sizes = [16, 32], strides = [1, 1]} : vector<16x128xf32> to vector<16x32xf32>
    %cst_31 = arith.constant dense<0.000000e+00> : vector<8x32xf32>
    %69 = tpu.matmul %67, %68, %cst_31 {dimension_numbers = #tpu.dot_dimension_numbers<[1], [0], [0], [1], [0, 0, 1, 1], [], []>} : vector<8x16xf32>, vector<16x32xf32>, vector<8x32xf32> -> vector<8x32xf32>
    %70 = vector.extract_strided_slice %63 {offsets = [16, 0], sizes = [8, 16], strides = [1, 1]} : vector<32x16xf32> to vector<8x16xf32>
    %71 = vector.extract_strided_slice %61 {offsets = [0, 64], sizes = [16, 32], strides = [1, 1]} : vector<16x128xf32> to vector<16x32xf32>
    %cst_32 = arith.constant dense<0.000000e+00> : vector<8x32xf32>
    %72 = tpu.matmul %70, %71, %cst_32 {dimension_numbers = #tpu.dot_dimension_numbers<[1], [0], [0], [1], [0, 0, 1, 1], [], []>} : vector<8x16xf32>, vector<16x32xf32>, vector<8x32xf32> -> vector<8x32xf32>
    %73 = vector.extract_strided_slice %63 {offsets = [24, 0], sizes = [8, 16], strides = [1, 1]} : vector<32x16xf32> to vector<8x16xf32>
    %74 = vector.extract_strided_slice %61 {offsets = [0, 96], sizes = [16, 32], strides = [1, 1]} : vector<16x128xf32> to vector<16x32xf32>
    %cst_33 = arith.constant dense<0.000000e+00> : vector<8x32xf32>
    %75 = tpu.matmul %73, %74, %cst_33 {dimension_numbers = #tpu.dot_dimension_numbers<[1], [0], [0], [1], [0, 0, 1, 1], [], []>} : vector<8x16xf32>, vector<16x32xf32>, vector<8x32xf32> -> vector<8x32xf32>
    %76 = tpu.concatenate %66, %69, %72, %75 in 1 : vector<8x32xf32>, vector<8x32xf32>, vector<8x32xf32>, vector<8x32xf32> -> vector<8x128xf32>
    %77 = vector.extract_strided_slice %18 {offsets = [16, 0], sizes = [16, 128], strides = [1, 1]} : vector<32x128xf32> to vector<16x128xf32>
    %78 = vector.extract_strided_slice %60 {offsets = [1, 0, 0], sizes = [1, 32, 16], strides = [1, 1, 1]} : vector<2x32x16xf32> to vector<1x32x16xf32>
    %79 = vector.shape_cast %78 : vector<1x32x16xf32> to vector<32x16xf32>
    %80 = vector.extract_strided_slice %79 {offsets = [0, 0], sizes = [8, 16], strides = [1, 1]} : vector<32x16xf32> to vector<8x16xf32>
    %81 = vector.extract_strided_slice %77 {offsets = [0, 0], sizes = [16, 32], strides = [1, 1]} : vector<16x128xf32> to vector<16x32xf32>
    %cst_34 = arith.constant dense<0.000000e+00> : vector<8x32xf32>
    %82 = tpu.matmul %80, %81, %cst_34 {dimension_numbers = #tpu.dot_dimension_numbers<[1], [0], [0], [1], [0, 0, 1, 1], [], []>} : vector<8x16xf32>, vector<16x32xf32>, vector<8x32xf32> -> vector<8x32xf32>
    %83 = vector.extract_strided_slice %79 {offsets = [8, 0], sizes = [8, 16], strides = [1, 1]} : vector<32x16xf32> to vector<8x16xf32>
    %84 = vector.extract_strided_slice %77 {offsets = [0, 32], sizes = [16, 32], strides = [1, 1]} : vector<16x128xf32> to vector<16x32xf32>
    %cst_35 = arith.constant dense<0.000000e+00> : vector<8x32xf32>
    %85 = tpu.matmul %83, %84, %cst_35 {dimension_numbers = #tpu.dot_dimension_numbers<[1], [0], [0], [1], [0, 0, 1, 1], [], []>} : vector<8x16xf32>, vector<16x32xf32>, vector<8x32xf32> -> vector<8x32xf32>
    %86 = vector.extract_strided_slice %79 {offsets = [16, 0], sizes = [8, 16], strides = [1, 1]} : vector<32x16xf32> to vector<8x16xf32>
    %87 = vector.extract_strided_slice %77 {offsets = [0, 64], sizes = [16, 32], strides = [1, 1]} : vector<16x128xf32> to vector<16x32xf32>
    %cst_36 = arith.constant dense<0.000000e+00> : vector<8x32xf32>
    %88 = tpu.matmul %86, %87, %cst_36 {dimension_numbers = #tpu.dot_dimension_numbers<[1], [0], [0], [1], [0, 0, 1, 1], [], []>} : vector<8x16xf32>, vector<16x32xf32>, vector<8x32xf32> -> vector<8x32xf32>
    %89 = vector.extract_strided_slice %79 {offsets = [24, 0], sizes = [8, 16], strides = [1, 1]} : vector<32x16xf32> to vector<8x16xf32>
    %90 = vector.extract_strided_slice %77 {offsets = [0, 96], sizes = [16, 32], strides = [1, 1]} : vector<16x128xf32> to vector<16x32xf32>
    %cst_37 = arith.constant dense<0.000000e+00> : vector<8x32xf32>
    %91 = tpu.matmul %89, %90, %cst_37 {dimension_numbers = #tpu.dot_dimension_numbers<[1], [0], [0], [1], [0, 0, 1, 1], [], []>} : vector<8x16xf32>, vector<16x32xf32>, vector<8x32xf32> -> vector<8x32xf32>
    %92 = tpu.concatenate %82, %85, %88, %91 in 1 : vector<8x32xf32>, vector<8x32xf32>, vector<8x32xf32>, vector<8x32xf32> -> vector<8x128xf32>
    %93 = tpu.concatenate %76, %92 in 0 : vector<8x128xf32>, vector<8x128xf32> -> vector<16x128xf32>
    %c0_38 = arith.constant 0 : index
    %c0_39 = arith.constant 0 : index
    %94 = vector.load %arg7[%c0_38, %c0_39] : memref<128x128xf32, #tpu.memory_space<vmem>>, vector<128x128xf32>
    %cst_40 = arith.constant dense<0.000000e+00> : vector<16x128xf32>
    %95 = tpu.matmul %93, %94, %cst_40 {dimension_numbers = #tpu.dot_dimension_numbers<[1], [0], [0], [1], [0, 0, 1, 1], [], []>} : vector<16x128xf32>, vector<128x128xf32>, vector<16x128xf32> -> vector<16x128xf32>
    %96 = arith.addf %5, %95 : vector<16x128xf32>
    %97 = vector.broadcast %1 : vector<1x128xf32> to vector<16x128xf32>
    %98 = arith.addf %96, %97 : vector<16x128xf32>
    %cst_41 = arith.constant dense<0.000000e+00> : vector<16xf32>
    %99 = vector.multi_reduction <add>, %98, %cst_41 [1] : vector<16x128xf32> to vector<16xf32>
    %100 = vector.shape_cast %99 : vector<16xf32> to vector<16x1xf32>
    %cst_42 = arith.constant 1.280000e+02 : f32
    %101 = vector.broadcast %cst_42 : f32 to vector<16x1xf32>
    %102 = arith.divf %100, %101 : vector<16x1xf32>
    %103 = vector.broadcast %102 : vector<16x1xf32> to vector<16x128xf32>
    %104 = arith.subf %98, %103 : vector<16x128xf32>
    %105 = arith.mulf %104, %104 : vector<16x128xf32>
    %cst_43 = arith.constant dense<0.000000e+00> : vector<16xf32>
    %106 = vector.multi_reduction <add>, %105, %cst_43 [1] : vector<16x128xf32> to vector<16xf32>
    %107 = vector.shape_cast %106 : vector<16xf32> to vector<16x1xf32>
    %cst_44 = arith.constant 1.280000e+02 : f32
    %108 = vector.broadcast %cst_44 : f32 to vector<16x1xf32>
    %109 = arith.divf %107, %108 : vector<16x1xf32>
    %cst_45 = arith.constant 9.99999974E-6 : f32
    %110 = vector.broadcast %cst_45 : f32 to vector<16x1xf32>
    %111 = arith.addf %109, %110 : vector<16x1xf32>
    %112 = math.rsqrt %111 : vector<16x1xf32>
    %113 = vector.broadcast %112 : vector<16x1xf32> to vector<16x128xf32>
    %114 = arith.mulf %104, %113 : vector<16x128xf32>
    %115 = vector.broadcast %2 : vector<1x128xf32> to vector<16x128xf32>
    %116 = arith.mulf %114, %115 : vector<16x128xf32>
    %117 = vector.broadcast %3 : vector<1x128xf32> to vector<16x128xf32>
    %118 = arith.addf %116, %117 : vector<16x128xf32>
    %119 = vector.shape_cast %118 : vector<16x128xf32> to vector<2x8x128xf32>
    %c0_46 = arith.constant 0 : index
    %c0_47 = arith.constant 0 : index
    %c0_48 = arith.constant 0 : index
    %120 = vector.load %arg9[%c0_46, %c0_47, %c0_48] : memref<2x8x128xf32, #tpu.memory_space<vmem>>, vector<2x8x128xf32>
    tpu.vector_store %arg9[%c0_46, %c0_47, %c0_48], %119 {strides = array<i32>} : memref<2x8x128xf32, #tpu.memory_space<vmem>>, vector<2x8x128xf32>,
    return
  }
  func.func @transform_0(%arg0: i32) -> (i32, i32, i32) {
    %c0_i32 = arith.constant 0 : i32
    %c0_i32_0 = arith.constant 0 : i32
    %c0_i32_1 = arith.constant 0 : i32
    return %arg0, %c0_i32, %c0_i32_0 : i32, i32, i32
  }
  func.func @transform_1(%arg0: i32) -> (i32, i32, i32) {
    %c0_i32 = arith.constant 0 : i32
    %c0_i32_0 = arith.constant 0 : i32
    %c0_i32_1 = arith.constant 0 : i32
    return %arg0, %c0_i32, %c0_i32_0 : i32, i32, i32
  }
  func.func @transform_2(%arg0: i32) -> (i32, i32, i32) {
    %c0_i32 = arith.constant 0 : i32
    %c0_i32_0 = arith.constant 0 : i32
    %c0_i32_1 = arith.constant 0 : i32
    return %arg0, %c0_i32, %c0_i32_0 : i32, i32, i32
  }
  func.func @transform_3(%arg0: i32) -> (i32, i32) {
    %c0_i32 = arith.constant 0 : i32
    %c0_i32_0 = arith.constant 0 : i32
    %c0_i32_1 = arith.constant 0 : i32
    return %c0_i32, %c0_i32_0 : i32, i32
  }
  func.func @transform_4(%arg0: i32) -> (i32, i32) {
    %c0_i32 = arith.constant 0 : i32
    %c0_i32_0 = arith.constant 0 : i32
    %c0_i32_1 = arith.constant 0 : i32
    return %c0_i32, %c0_i32_0 : i32, i32
  }
  func.func @transform_5(%arg0: i32) -> (i32, i32) {
    %c0_i32 = arith.constant 0 : i32
    %c0_i32_0 = arith.constant 0 : i32
    %c0_i32_1 = arith.constant 0 : i32
    return %c0_i32, %c0_i32_0 : i32, i32
  }
  func.func @transform_6(%arg0: i32) -> (i32, i32) {
    %c0_i32 = arith.constant 0 : i32
    %c0_i32_0 = arith.constant 0 : i32
    %c0_i32_1 = arith.constant 0 : i32
    return %c0_i32, %c0_i32_0 : i32, i32
  }
  func.func @transform_7(%arg0: i32) -> (i32, i32) {
    %c0_i32 = arith.constant 0 : i32
    %c0_i32_0 = arith.constant 0 : i32
    %c0_i32_1 = arith.constant 0 : i32
    return %c0_i32, %c0_i32_0 : i32, i32
  }
  func.func @transform_8(%arg0: i32) -> (i32, i32, i32) {
    %c0_i32 = arith.constant 0 : i32
    %c0_i32_0 = arith.constant 0 : i32
    %c0_i32_1 = arith.constant 0 : i32
    return %arg0, %c0_i32, %c0_i32_0 : i32, i32, i32
  }
}

</mosaic_0001>

<llo_original>
// kernel: cross_attention_block.1
$region0: #{cross_attention_block.1}
  #allocation0 [shape = 'u32[]', space=smem, size = 0x4, offset = 0x4, fixed_abs, tag = 'smem constant byte address 0x4 - core index']
  #allocation1 [shape = 'u32[144,128]{1,0:T(1,128)}', space=vmem, size = 0x12000, scoped, tag = 'internal scratch']
  %s0 = inlined_call_operand.hbm [shape: f32[2,8,128], index: 0, kind: input, shape index: {}]
  %s1 = inlined_call_operand.hbm [shape: f32[2,16,128], index: 1, kind: input, shape index: {}]
  %s2 = inlined_call_operand.vmem [shape: f32[2,1,16], index: 2, kind: input, shape index: {}]
  %s3 = inlined_call_operand.hbm [shape: f32[128,128], index: 3, kind: input, shape index: {}]
  %s4 = inlined_call_operand.hbm [shape: f32[128,256], index: 4, kind: input, shape index: {}]
  %s5 = inlined_call_operand.vmem [shape: f32[1,256], index: 5, kind: input, shape index: {}]
  %s6 = inlined_call_operand.hbm [shape: f32[128,128], index: 6, kind: input, shape index: {}]
  %s7 = inlined_call_operand.vmem [shape: f32[4,128], index: 7, kind: input, shape index: {}]
  %s8 = inlined_call_operand.hbm [shape: f32[2,8,128], index: 8, kind: output, shape index: {}]
  %s9 = sld [smem:[#allocation0]]
  $region62: #{cross_attention_block.1} parent=0
    _
  %s11 = ssub.s32 1, %s9
  %s12 = scalar_select 0, %s11, %s9
  $region1: #{cross_attention_block.1} parent=0
    #allocation2 [shape = 'u8[8192]{0}', space=vmem, size = 0x2000, scoped, tag = 'input window, operand 0, single buffered']
    #allocation3 [shape = 's32[1]{0}', space=sflag, size = 0x4, scoped, tag = 'scoped memory for cross_attention_block.1']
    #allocation4 [shape = 's32[1]{0}', space=sflag, size = 0x4, scoped, tag = 'scoped memory for cross_attention_block.1']
    #allocation5 [shape = 'u8[16384]{0}', space=vmem, size = 0x4000, scoped, tag = 'input window, operand 1, single buffered']
    #allocation6 [shape = 's32[1]{0}', space=sflag, size = 0x4, scoped, tag = 'scoped memory for cross_attention_block.1']
    #allocation7 [shape = 'u8[65536]{0}', space=vmem, size = 0x10000, scoped, tag = 'input window, operand 3, single buffered']
    #allocation8 [shape = 'u8[131072]{0}', space=vmem, size = 0x20000, scoped, tag = 'input window, operand 4, single buffered']
    #allocation9 [shape = 's32[1]{0}', space=sflag, size = 0x4, scoped, tag = 'scoped memory for cross_attention_block.1']
    #allocation10 [shape = 'u8[65536]{0}', space=vmem, size = 0x10000, scoped, tag = 'input window, operand 6, single buffered']
    #allocation11 [shape = 'u8[8192]{0}', space=vmem, size = 0x2000, scoped, tag = 'output window, operand 0, single buffered']
    %13 = vsyncpa [#allocation3], 0
    %14 = vsyncpa [#allocation6], 0
    %15 = vsyncpa [#allocation9], 0
    %16 = vsyncpa [#allocation4], 0
    // Predicated region
    $region2: #{cross_attention_block.1} parent=1 // pred_check
      _
    $region3: #{cross_attention_block.1} parent=1 // pred_check_branch
      %18 = sbr.rel (0) target = $region5
    $region4: #{cross_attention_block.1} parent=1 // pred_region
      %s20 = ssub.s32 256, 256
      %21 = vsyncadd [#allocation3], %s20
      %s22 = sshll.u32 [#allocation2], 4
      %s23 = int_to_ptr.vmem [resolvable:$true] %s22
      %28 = dma.hbm_to_vmem [thread:$0]  %s0, 256, %s23, [#allocation3], 128, 128, 8
    $region5: #{cross_attention_block.1} parent=1 // pred_fallthru
      _
    // Predicated region
    $region6: #{cross_attention_block.1} parent=1 // pred_check
      _
    $region7: #{cross_attention_block.1} parent=1 // pred_check_branch
      %30 = sbr.rel (0) target = $region9
    $region8: #{cross_attention_block.1} parent=1 // pred_region
      %s32 = ssub.s32 512, 512
      %33 = vsyncadd [#allocation6], %s32
      %s34 = sshll.u32 [#allocation5], 4
      %s35 = int_to_ptr.vmem [resolvable:$true] %s34
      %40 = dma.hbm_to_vmem [thread:$0]  %s1, 512, %s35, [#allocation6], 128, 128, 8
    $region9: #{cross_attention_block.1} parent=1 // pred_fallthru
      _
    // Predicated region
    $region10: #{cross_attention_block.1} parent=1 // pred_check
      _
    $region11: #{cross_attention_block.1} parent=1 // pred_check_branch
      %42 = sbr.rel (0) target = $region13
    $region12: #{cross_attention_block.1} parent=1 // pred_region
      _
    $region13: #{cross_attention_block.1} parent=1 // pred_fallthru
      _
    // Predicated region
    $region14: #{cross_attention_block.1} parent=1 // pred_check
      _
    $region15: #{cross_attention_block.1} parent=1 // pred_check_branch
      %44 = sbr.rel (0) target = $region17
    $region16: #{cross_attention_block.1} parent=1 // pred_region
      %s46 = ssub.s32 2048, 2048
      %47 = vsyncadd [#allocation6], %s46
      %s48 = sshll.u32 [#allocation7], 4
      %s49 = int_to_ptr.vmem [resolvable:$true] %s48
      %54 = dma.hbm_to_vmem [thread:$0]  %s3, 2048, %s49, [#allocation6], 128, 128, 8
    $region17: #{cross_attention_block.1} parent=1 // pred_fallthru
      _
    // Predicated region
    $region18: #{cross_attention_block.1} parent=1 // pred_check
      _
    $region19: #{cross_attention_block.1} parent=1 // pred_check_branch
      %56 = sbr.rel (0) target = $region21
    $region20: #{cross_attention_block.1} parent=1 // pred_region
      %s58 = ssub.s32 4096, 4096
      %59 = vsyncadd [#allocation9], %s58
      %s60 = sshll.u32 [#allocation8], 4
      %s61 = int_to_ptr.vmem [resolvable:$true] %s60
      %66 = dma.hbm_to_vmem [thread:$0]  %s4, 4096, %s61, [#allocation9], 256, 256, 16
    $region21: #{cross_attention_block.1} parent=1 // pred_fallthru
      _
    // Predicated region
    $region22: #{cross_attention_block.1} parent=1 // pred_check
      _
    $region23: #{cross_attention_block.1} parent=1 // pred_check_branch
      %68 = sbr.rel (0) target = $region25
    $region24: #{cross_attention_block.1} parent=1 // pred_region
      _
    $region25: #{cross_attention_block.1} parent=1 // pred_fallthru
      _
    // Predicated region
    $region26: #{cross_attention_block.1} parent=1 // pred_check
      _
    $region27: #{cross_attention_block.1} parent=1 // pred_check_branch
      %70 = sbr.rel (0) target = $region29
    $region28: #{cross_attention_block.1} parent=1 // pred_region
      %s72 = ssub.s32 2048, 2048
      %73 = vsyncadd [#allocation9], %s72
      %s74 = sshll.u32 [#allocation10], 4
      %s75 = int_to_ptr.vmem [resolvable:$true] %s74
      %80 = dma.hbm_to_vmem [thread:$0]  %s6, 2048, %s75, [#allocation9], 128, 128, 8
    $region29: #{cross_attention_block.1} parent=1 // pred_fallthru
      _
    // Predicated region
    $region30: #{cross_attention_block.1} parent=1 // pred_check
      _
    $region31: #{cross_attention_block.1} parent=1 // pred_check_branch
      %82 = sbr.rel (0) target = $region33
    $region32: #{cross_attention_block.1} parent=1 // pred_region
      _
    $region33: #{cross_attention_block.1} parent=1 // pred_fallthru
      _
    // Predicated region
    $region34: #{cross_attention_block.1} parent=1 // pred_check
      _
    $region35: #{cross_attention_block.1} parent=1 // pred_check_branch
      %84 = sbr.rel (0) target = $region37
    $region36: #{cross_attention_block.1} parent=1 // pred_region
      %85 = dma.done [#allocation3], 256
    $region37: #{cross_attention_block.1} parent=1 // pred_fallthru
      _
    // Predicated region
    $region38: #{cross_attention_block.1} parent=1 // pred_check
      _
    $region39: #{cross_attention_block.1} parent=1 // pred_check_branch
      %87 = sbr.rel (0) target = $region41
    $region40: #{cross_attention_block.1} parent=1 // pred_region
      %88 = dma.done [#allocation6], 512
    $region41: #{cross_attention_block.1} parent=1 // pred_fallthru
      _
    // Predicated region
    $region42: #{cross_attention_block.1} parent=1 // pred_check
      _
    $region43: #{cross_attention_block.1} parent=1 // pred_check_branch
      %90 = sbr.rel (0) target = $region45
    $region44: #{cross_attention_block.1} parent=1 // pred_region
      %91 = dma.done [#allocation6], 2048
    $region45: #{cross_attention_block.1} parent=1 // pred_fallthru
      _
    // Predicated region
    $region46: #{cross_attention_block.1} parent=1 // pred_check
      _
    $region47: #{cross_attention_block.1} parent=1 // pred_check_branch
      %93 = sbr.rel (0) target = $region49
    $region48: #{cross_attention_block.1} parent=1 // pred_region
      %94 = dma.done [#allocation9], 4096
    $region49: #{cross_attention_block.1} parent=1 // pred_fallthru
      _
    // Predicated region
    $region50: #{cross_attention_block.1} parent=1 // pred_check
      _
    $region51: #{cross_attention_block.1} parent=1 // pred_check_branch
      %96 = sbr.rel (0) target = $region53
    $region52: #{cross_attention_block.1} parent=1 // pred_region
      %97 = dma.done [#allocation9], 2048
    $region53: #{cross_attention_block.1} parent=1 // pred_fallthru
      _
    %v98 = vld [vmem:[%s7] sm:$0x1]
    %v99 = vld [vmem:[%s7 + $0x1] sm:$0x1]
    %v100 = vld [vmem:[%s7 + $0x2] sm:$0x1]
    %v101 = vld [vmem:[%s7 + $0x3] sm:$0x1]
    %v102 = vld [vmem:[#allocation2] sm:$0xff]
    %v103 = vld [vmem:[#allocation2 + $0x8] sm:$0xff]
    %v104 = vld [vmem:[#allocation5] sm:$0xff]
    %v105 = vld [vmem:[#allocation5 + $0x8] sm:$0xff]
    %v106 = vld [vmem:[#allocation5 + $0x10] sm:$0xff]
    %v107 = vld [vmem:[#allocation5 + $0x18] sm:$0xff]
    %v108 = vld [vmem:[#allocation7] sm:$0xff]
    %v109 = vld [vmem:[#allocation7 + $0x8] sm:$0xff]
    %v110 = vld [vmem:[#allocation7 + $0x10] sm:$0xff]
    %v111 = vld [vmem:[#allocation7 + $0x18] sm:$0xff]
    %v112 = vld [vmem:[#allocation7 + $0x20] sm:$0xff]
    %v113 = vld [vmem:[#allocation7 + $0x28] sm:$0xff]
    %v114 = vld [vmem:[#allocation7 + $0x30] sm:$0xff]
    %v115 = vld [vmem:[#allocation7 + $0x38] sm:$0xff]
    %v116 = vld [vmem:[#allocation7 + $0x40] sm:$0xff]
    %v117 = vld [vmem:[#allocation7 + $0x48] sm:$0xff]
    %v118 = vld [vmem:[#allocation7 + $0x50] sm:$0xff]
    %v119 = vld [vmem:[#allocation7 + $0x58] sm:$0xff]
    %v120 = vld [vmem:[#allocation7 + $0x60] sm:$0xff]
    %v121 = vld [vmem:[#allocation7 + $0x68] sm:$0xff]
    %v122 = vld [vmem:[#allocation7 + $0x70] sm:$0xff]
    %v123 = vld [vmem:[#allocation7 + $0x78] sm:$0xff]
    %v124 = vlaneseq
    %v125 = vshrl.u32 %v124, 7
    %v126 = vsub.s32 0, %v125
    %v127 = vrot.slane %v98, %v126
    %128 = vmatprep.subr.mxu0 0.0
    %129 = vmatpush1.msra.mxu0 %v108
    %130 = vmatprep.subr.mxu0 0.0
    %131 = vmatpush1.msra.mxu0 %v109
    %132 = vmatprep.subr.mxu0 0.0
    %133 = vmatpush1.msra.mxu0 %v110
    %134 = vmatprep.subr.mxu0 0.0
    %135 = vmatpush1.msra.mxu0 %v111
    %136 = vmatprep.subr.mxu0 0.0
    %137 = vmatpush1.msra.mxu0 %v112
    %138 = vmatprep.subr.mxu0 0.0
    %139 = vmatpush1.msra.mxu0 %v113
    %140 = vmatprep.subr.mxu0 0.0
    %141 = vmatpush1.msra.mxu0 %v114
    %142 = vmatprep.subr.mxu0 0.0
    %143 = vmatpush1.msra.mxu0 %v115
    %144 = vmatprep.subr.mxu0 0.0
    %145 = vmatpush1.msra.mxu0 %v116
    %146 = vmatprep.subr.mxu0 0.0
    %147 = vmatpush1.msra.mxu0 %v117
    %148 = vmatprep.subr.mxu0 0.0
    %149 = vmatpush1.msra.mxu0 %v118
    %150 = vmatprep.subr.mxu0 0.0
    %151 = vmatpush1.msra.mxu0 %v119
    %152 = vmatprep.subr.mxu0 0.0
    %153 = vmatpush1.msra.mxu0 %v120
    %154 = vmatprep.subr.mxu0 0.0
    %155 = vmatpush1.msra.mxu0 %v121
    %156 = vmatprep.subr.mxu0 0.0
    %157 = vmatpush1.msra.mxu0 %v122
    %158 = vmatprep.subr.mxu0 0.0
    %159 = vmatpush1.msra.mxu0 %v123
    %160 = vmatprep.subr.mxu0 0.0
    %161 = vmatpush1.msra.mxu0 0.0
    %162 = vmatprep.subr.mxu0 0.0
    %163 = vmatpush1.msra.mxu0 0.0
    %164 = vmatprep.subr.mxu0 0.0
    %165 = vmatpush1.msra.mxu0 0.0
    %166 = vmatprep.subr.mxu0 0.0
    %167 = vmatpush1.msra.mxu0 0.0
    %168 = vmatprep.subr.mxu0 0.0
    %169 = vmatpush1.msra.mxu0 0.0
    %170 = vmatprep.subr.mxu0 0.0
    %171 = vmatpush1.msra.mxu0 0.0
    %172 = vmatprep.subr.mxu0 0.0
    %173 = vmatpush1.msra.mxu0 0.0
    %174 = vmatprep.subr.mxu0 0.0
    %175 = vmatpush1.msra.mxu0 0.0
    %176 = vmatprep.subr.mxu0 0.0
    %177 = vmatpush1.msra.mxu0 0.0
    %178 = vmatprep.subr.mxu0 0.0
    %179 = vmatpush1.msra.mxu0 0.0
    %180 = vmatprep.subr.mxu0 0.0
    %181 = vmatpush1.msra.mxu0 0.0
    %182 = vmatprep.subr.mxu0 0.0
    %183 = vmatpush1.msra.mxu0 0.0
    %184 = vmatprep.subr.mxu0 0.0
    %185 = vmatpush1.msra.mxu0 0.0
    %186 = vmatprep.subr.mxu0 0.0
    %187 = vmatpush1.msra.mxu0 0.0
    %188 = vmatprep.subr.mxu0 0.0
    %189 = vmatpush1.msra.mxu0 0.0
    %190 = vmatprep.subr.mxu0 0.0
    %191 = vmatpush1.msra.mxu0 0.0
    %192 = vmatprep.mubr.f32.mxu0 0.0
    %193 = vmatmul.mubr.f32.gmra.mrb[0].mxu0 %v102
    %v194 = vpop.f32.mrb[0].mxu0
    %v195 = vadd.f32 %v127, %v194
    %v196 = vpop.f32.mrb[0].mxu0
    %197 = vmatprep.mubr.f32.mxu0 0.0
    %198 = vmatmul.mubr.f32.gmra.mrb[0].mxu0 %v103
    %v199 = vpop.f32.mrb[0].mxu0
    %v200 = vadd.f32 %v127, %v199
    %v201 = vpop.f32.mrb[0].mxu0
    %202 = vdwg.mxu0
    %v203 = vld [vmem:[#allocation8] sm:$0xff]
    %v204 = vld [vmem:[#allocation8 + $0x8] sm:$0xff]
    %v205 = vld [vmem:[#allocation8 + $0x10] sm:$0xff]
    %v206 = vld [vmem:[#allocation8 + $0x18] sm:$0xff]
    %v207 = vld [vmem:[#allocation8 + $0x20] sm:$0xff]
    %v208 = vld [vmem:[#allocation8 + $0x28] sm:$0xff]
    %v209 = vld [vmem:[#allocation8 + $0x30] sm:$0xff]
    %v210 = vld [vmem:[#allocation8 + $0x38] sm:$0xff]
    %v211 = vld [vmem:[#allocation8 + $0x40] sm:$0xff]
    %v212 = vld [vmem:[#allocation8 + $0x48] sm:$0xff]
    %v213 = vld [vmem:[#allocation8 + $0x50] sm:$0xff]
    %v214 = vld [vmem:[#allocation8 + $0x58] sm:$0xff]
    %v215 = vld [vmem:[#allocation8 + $0x60] sm:$0xff]
    %v216 = vld [vmem:[#allocation8 + $0x68] sm:$0xff]
    %v217 = vld [vmem:[#allocation8 + $0x70] sm:$0xff]
    %v218 = vld [vmem:[#allocation8 + $0x78] sm:$0xff]
    %v219 = vld [vmem:[#allocation8 + $0x80] sm:$0xff]
    %v220 = vld [vmem:[#allocation8 + $0x88] sm:$0xff]
    %v221 = vld [vmem:[#allocation8 + $0x90] sm:$0xff]
    %v222 = vld [vmem:[#allocation8 + $0x98] sm:$0xff]
    %v223 = vld [vmem:[#allocation8 + $0xa0] sm:$0xff]
    %v224 = vld [vmem:[#allocation8 + $0xa8] sm:$0xff]
    %v225 = vld [vmem:[#allocation8 + $0xb0] sm:$0xff]
    %v226 = vld [vmem:[#allocation8 + $0xb8] sm:$0xff]
    %v227 = vld [vmem:[#allocation8 + $0xc0] sm:$0xff]
    %v228 = vld [vmem:[#allocation8 + $0xc8] sm:$0xff]
    %v229 = vld [vmem:[#allocation8 + $0xd0] sm:$0xff]
    %v230 = vld [vmem:[#allocation8 + $0xd8] sm:$0xff]
    %v231 = vld [vmem:[#allocation8 + $0xe0] sm:$0xff]
    %v232 = vld [vmem:[#allocation8 + $0xe8] sm:$0xff]
    %v233 = vld [vmem:[#allocation8 + $0xf0] sm:$0xff]
    %v234 = vld [vmem:[#allocation8 + $0xf8] sm:$0xff]
    %v235 = vld [vmem:[%s5] sm:$0x3]
    %v237 = vlaneseq
    %v238 = vshrl.u32 %v237, 7
    %v239 = vsub.s32 0, %v238
    %v240 = vrot.slane %v235, %v239
    %v241 = vlaneseq
    %v242 = vshrl.u32 %v241, 7
    %v243 = vsub.s32 1, %v242
    %v244 = vrot.slane %v235, %v243
    %247 = vmatprep.subr.mxu0 %v204
    %248 = vmatpush1.msra.mxu0 %v203
    %249 = vmatprep.subr.mxu0 %v206
    %250 = vmatpush1.msra.mxu0 %v205
    %251 = vmatprep.subr.mxu0 %v208
    %252 = vmatpush1.msra.mxu0 %v207
    %253 = vmatprep.subr.mxu0 %v210
    %254 = vmatpush1.msra.mxu0 %v209
    %255 = vmatprep.subr.mxu0 %v212
    %256 = vmatpush1.msra.mxu0 %v211
    %257 = vmatprep.subr.mxu0 %v214
    %258 = vmatpush1.msra.mxu0 %v213
    %259 = vmatprep.subr.mxu0 %v216
    %260 = vmatpush1.msra.mxu0 %v215
    %261 = vmatprep.subr.mxu0 %v218
    %262 = vmatpush1.msra.mxu0 %v217
    %263 = vmatprep.subr.mxu0 %v220
    %264 = vmatpush1.msra.mxu0 %v219
    %265 = vmatprep.subr.mxu0 %v222
    %266 = vmatpush1.msra.mxu0 %v221
    %267 = vmatprep.subr.mxu0 %v224
    %268 = vmatpush1.msra.mxu0 %v223
    %269 = vmatprep.subr.mxu0 %v226
    %270 = vmatpush1.msra.mxu0 %v225
    %271 = vmatprep.subr.mxu0 %v228
    %272 = vmatpush1.msra.mxu0 %v227
    %273 = vmatprep.subr.mxu0 %v230
    %274 = vmatpush1.msra.mxu0 %v229
    %275 = vmatprep.subr.mxu0 %v232
    %276 = vmatpush1.msra.mxu0 %v231
    %277 = vmatprep.subr.mxu0 %v234
    %278 = vmatpush1.msra.mxu0 %v233
    %279 = vmatprep.subr.mxu0 0.0
    %280 = vmatpush1.msra.mxu0 0.0
    %281 = vmatprep.subr.mxu0 0.0
    %282 = vmatpush1.msra.mxu0 0.0
    %283 = vmatprep.subr.mxu0 0.0
    %284 = vmatpush1.msra.mxu0 0.0
    %285 = vmatprep.subr.mxu0 0.0
    %286 = vmatpush1.msra.mxu0 0.0
    %287 = vmatprep.subr.mxu0 0.0
    %288 = vmatpush1.msra.mxu0 0.0
    %289 = vmatprep.subr.mxu0 0.0
    %290 = vmatpush1.msra.mxu0 0.0
    %291 = vmatprep.subr.mxu0 0.0
    %292 = vmatpush1.msra.mxu0 0.0
    %293 = vmatprep.subr.mxu0 0.0
    %294 = vmatpush1.msra.mxu0 0.0
    %295 = vmatprep.subr.mxu0 0.0
    %296 = vmatpush1.msra.mxu0 0.0
    %297 = vmatprep.subr.mxu0 0.0
    %298 = vmatpush1.msra.mxu0 0.0
    %299 = vmatprep.subr.mxu0 0.0
    %300 = vmatpush1.msra.mxu0 0.0
    %301 = vmatprep.subr.mxu0 0.0
    %302 = vmatpush1.msra.mxu0 0.0
    %303 = vmatprep.subr.mxu0 0.0
    %304 = vmatpush1.msra.mxu0 0.0
    %305 = vmatprep.subr.mxu0 0.0
    %306 = vmatpush1.msra.mxu0 0.0
    %307 = vmatprep.subr.mxu0 0.0
    %308 = vmatpush1.msra.mxu0 0.0
    %309 = vmatprep.subr.mxu0 0.0
    %310 = vmatpush1.msra.mxu0 0.0
    %311 = vmatprep.mubr.f32.mxu0 0.0
    %312 = vmatmul.mubr.f32.gmra.mrb[0].mxu0 %v104
    %v313 = vpop.f32.mrb[0].mxu0
    %v314 = vadd.f32 %v240, %v313
    %v315 = vpop.f32.mrb[0].mxu0
    %v316 = vadd.f32 %v244, %v315
    %317 = vmatprep.mubr.f32.mxu0 0.0
    %318 = vmatmul.mubr.f32.gmra.mrb[0].mxu0 %v105
    %v319 = vpop.f32.mrb[0].mxu0
    %v320 = vadd.f32 %v240, %v319
    %v321 = vpop.f32.mrb[0].mxu0
    %v322 = vadd.f32 %v244, %v321
    %323 = vmatprep.mubr.f32.mxu0 0.0
    %324 = vmatmul.mubr.f32.gmra.mrb[0].mxu0 %v106
    %v325 = vpop.f32.mrb[0].mxu0
    %v326 = vadd.f32 %v240, %v325
    %v327 = vpop.f32.mrb[0].mxu0
    %v328 = vadd.f32 %v244, %v327
    %329 = vmatprep.mubr.f32.mxu0 0.0
    %330 = vmatmul.mubr.f32.gmra.mrb[0].mxu0 %v107
    %v331 = vpop.f32.mrb[0].mxu0
    %v332 = vadd.f32 %v240, %v331
    %v333 = vpop.f32.mrb[0].mxu0
    %v334 = vadd.f32 %v244, %v333
    %335 = vdwg.mxu0
    %vm336 = vcmask 261120
    %v338 = vsel %vm336, %v195, 0
    %v341 = vsel %vm336, %v314, 0
    %v344 = vsel %vm336, %v320, 0
    %346 = vmatprep.subr.mxu0 0.0
    %347 = vmatpush1.xpose.msra.mxu0 %v341
    %348 = vmatprep.subr.mxu0 0.0
    %349 = vmatpush1.xpose.msra.mxu0 %v344
    %350 = vmatprep.subr.mxu0 0.0
    %351 = vmatpush1.xpose.msra.mxu0 0.0
    %352 = vmatprep.subr.mxu0 0.0
    %353 = vmatpush1.xpose.msra.mxu0 0.0
    %354 = vmatprep.subr.mxu0 0.0
    %355 = vmatpush1.xpose.msra.mxu0 0.0
    %356 = vmatprep.subr.mxu0 0.0
    %357 = vmatpush1.xpose.msra.mxu0 0.0
    %358 = vmatprep.subr.mxu0 0.0
    %359 = vmatpush1.xpose.msra.mxu0 0.0
    %360 = vmatprep.subr.mxu0 0.0
    %361 = vmatpush1.xpose.msra.mxu0 0.0
    %362 = vmatprep.subr.mxu0 0.0
    %363 = vmatpush1.xpose.msra.mxu0 0.0
    %364 = vmatprep.subr.mxu0 0.0
    %365 = vmatpush1.xpose.msra.mxu0 0.0
    %366 = vmatprep.subr.mxu0 0.0
    %367 = vmatpush1.xpose.msra.mxu0 0.0
    %368 = vmatprep.subr.mxu0 0.0
    %369 = vmatpush1.xpose.msra.mxu0 0.0
    %370 = vmatprep.subr.mxu0 0.0
    %371 = vmatpush1.xpose.msra.mxu0 0.0
    %372 = vmatprep.subr.mxu0 0.0
    %373 = vmatpush1.xpose.msra.mxu0 0.0
    %374 = vmatprep.subr.mxu0 0.0
    %375 = vmatpush1.xpose.msra.mxu0 0.0
    %376 = vmatprep.subr.mxu0 0.0
    %377 = vmatpush1.xpose.msra.mxu0 0.0
    %378 = vmatprep.subr.mxu0 0.0
    %379 = vmatpush1.xpose.msra.mxu0 0.0
    %380 = vmatprep.subr.mxu0 0.0
    %381 = vmatpush1.xpose.msra.mxu0 0.0
    %382 = vmatprep.subr.mxu0 0.0
    %383 = vmatpush1.xpose.msra.mxu0 0.0
    %384 = vmatprep.subr.mxu0 0.0
    %385 = vmatpush1.xpose.msra.mxu0 0.0
    %386 = vmatprep.subr.mxu0 0.0
    %387 = vmatpush1.xpose.msra.mxu0 0.0
    %388 = vmatprep.subr.mxu0 0.0
    %389 = vmatpush1.xpose.msra.mxu0 0.0
    %390 = vmatprep.subr.mxu0 0.0
    %391 = vmatpush1.xpose.msra.mxu0 0.0
    %392 = vmatprep.subr.mxu0 0.0
    %393 = vmatpush1.xpose.msra.mxu0 0.0
    %394 = vmatprep.subr.mxu0 0.0
    %395 = vmatpush1.xpose.msra.mxu0 0.0
    %396 = vmatprep.subr.mxu0 0.0
    %397 = vmatpush1.xpose.msra.mxu0 0.0
    %398 = vmatprep.subr.mxu0 0.0
    %399 = vmatpush1.xpose.msra.mxu0 0.0
    %400 = vmatprep.subr.mxu0 0.0
    %401 = vmatpush1.xpose.msra.mxu0 0.0
    %402 = vmatprep.subr.mxu0 0.0
    %403 = vmatpush1.xpose.msra.mxu0 0.0
    %404 = vmatprep.subr.mxu0 0.0
    %405 = vmatpush1.xpose.msra.mxu0 0.0
    %406 = vmatprep.subr.mxu0 0.0
    %407 = vmatpush1.xpose.msra.mxu0 0.0
    %408 = vmatprep.subr.mxu0 0.0
    %409 = vmatpush1.xpose.msra.mxu0 0.0
    %410 = vmatprep.mubr.f32.mxu0 0.0
    %411 = vmatmul.mubr.f32.gmra.mrb[0].mxu0 %v338
    %v412 = vpop.f32.mrb[0].mxu0
    %v413 = vadd.f32 0.0, %v412
    %v414 = vpop.f32.mrb[0].mxu0
    %415 = vdwg.mxu0
    %416 = vrot.lane.b32.xlu0 %v195, 96
    %v417 = vpop.permute.xlu0 %416
    %418 = vrot.lane.b32.xlu0 %v314, 96
    %v419 = vpop.permute.xlu0 %418
    %420 = vrot.lane.b32.xlu0 %v320, 96
    %v421 = vpop.permute.xlu0 %420
    %v422 = vsel %vm336, %v417, 0
    %v424 = vsel %vm336, %v419, 0
    %v426 = vsel %vm336, %v421, 0
    %428 = vmatprep.subr.mxu0 0.0
    %429 = vmatpush1.xpose.msra.mxu0 %v424
    %430 = vmatprep.subr.mxu0 0.0
    %431 = vmatpush1.xpose.msra.mxu0 %v426
    %432 = vmatprep.subr.mxu0 0.0
    %433 = vmatpush1.xpose.msra.mxu0 0.0
    %434 = vmatprep.subr.mxu0 0.0
    %435 = vmatpush1.xpose.msra.mxu0 0.0
    %436 = vmatprep.subr.mxu0 0.0
    %437 = vmatpush1.xpose.msra.mxu0 0.0
    %438 = vmatprep.subr.mxu0 0.0
    %439 = vmatpush1.xpose.msra.mxu0 0.0
    %440 = vmatprep.subr.mxu0 0.0
    %441 = vmatpush1.xpose.msra.mxu0 0.0
    %442 = vmatprep.subr.mxu0 0.0
    %443 = vmatpush1.xpose.msra.mxu0 0.0
    %444 = vmatprep.subr.mxu0 0.0
    %445 = vmatpush1.xpose.msra.mxu0 0.0
    %446 = vmatprep.subr.mxu0 0.0
    %447 = vmatpush1.xpose.msra.mxu0 0.0
    %448 = vmatprep.subr.mxu0 0.0
    %449 = vmatpush1.xpose.msra.mxu0 0.0
    %450 = vmatprep.subr.mxu0 0.0
    %451 = vmatpush1.xpose.msra.mxu0 0.0
    %452 = vmatprep.subr.mxu0 0.0
    %453 = vmatpush1.xpose.msra.mxu0 0.0
    %454 = vmatprep.subr.mxu0 0.0
    %455 = vmatpush1.xpose.msra.mxu0 0.0
    %456 = vmatprep.subr.mxu0 0.0
    %457 = vmatpush1.xpose.msra.mxu0 0.0
    %458 = vmatprep.subr.mxu0 0.0
    %459 = vmatpush1.xpose.msra.mxu0 0.0
    %460 = vmatprep.subr.mxu0 0.0
    %461 = vmatpush1.xpose.msra.mxu0 0.0
    %462 = vmatprep.subr.mxu0 0.0
    %463 = vmatpush1.xpose.msra.mxu0 0.0
    %464 = vmatprep.subr.mxu0 0.0
    %465 = vmatpush1.xpose.msra.mxu0 0.0
    %466 = vmatprep.subr.mxu0 0.0
    %467 = vmatpush1.xpose.msra.mxu0 0.0
    %468 = vmatprep.subr.mxu0 0.0
    %469 = vmatpush1.xpose.msra.mxu0 0.0
    %470 = vmatprep.subr.mxu0 0.0
    %471 = vmatpush1.xpose.msra.mxu0 0.0
    %472 = vmatprep.subr.mxu0 0.0
    %473 = vmatpush1.xpose.msra.mxu0 0.0
    %474 = vmatprep.subr.mxu0 0.0
    %475 = vmatpush1.xpose.msra.mxu0 0.0
    %476 = vmatprep.subr.mxu0 0.0
    %477 = vmatpush1.xpose.msra.mxu0 0.0
    %478 = vmatprep.subr.mxu0 0.0
    %479 = vmatpush1.xpose.msra.mxu0 0.0
    %480 = vmatprep.subr.mxu0 0.0
    %481 = vmatpush1.xpose.msra.mxu0 0.0
    %482 = vmatprep.subr.mxu0 0.0
    %483 = vmatpush1.xpose.msra.mxu0 0.0
    %484 = vmatprep.subr.mxu0 0.0
    %485 = vmatpush1.xpose.msra.mxu0 0.0
    %486 = vmatprep.subr.mxu0 0.0
    %487 = vmatpush1.xpose.msra.mxu0 0.0
    %488 = vmatprep.subr.mxu0 0.0
    %489 = vmatpush1.xpose.msra.mxu0 0.0
    %490 = vmatprep.subr.mxu0 0.0
    %491 = vmatpush1.xpose.msra.mxu0 0.0
    %492 = vmatprep.mubr.f32.mxu0 0.0
    %493 = vmatmul.mubr.f32.gmra.mrb[0].mxu0 %v422
    %v494 = vpop.f32.mrb[0].mxu0
    %v495 = vadd.f32 0.0, %v494
    %v496 = vpop.f32.mrb[0].mxu0
    %497 = vdwg.mxu0
    %498 = vrot.lane.b32.xlu0 %v195, 64
    %v499 = vpop.permute.xlu0 %498
    %500 = vrot.lane.b32.xlu0 %v314, 64
    %v501 = vpop.permute.xlu0 %500
    %502 = vrot.lane.b32.xlu0 %v320, 64
    %v503 = vpop.permute.xlu0 %502
    %v504 = vsel %vm336, %v499, 0
    %v506 = vsel %vm336, %v501, 0
    %v508 = vsel %vm336, %v503, 0
    %510 = vmatprep.subr.mxu0 0.0
    %511 = vmatpush1.xpose.msra.mxu0 %v506
    %512 = vmatprep.subr.mxu0 0.0
    %513 = vmatpush1.xpose.msra.mxu0 %v508
    %514 = vmatprep.subr.mxu0 0.0
    %515 = vmatpush1.xpose.msra.mxu0 0.0
    %516 = vmatprep.subr.mxu0 0.0
    %517 = vmatpush1.xpose.msra.mxu0 0.0
    %518 = vmatprep.subr.mxu0 0.0
    %519 = vmatpush1.xpose.msra.mxu0 0.0
    %520 = vmatprep.subr.mxu0 0.0
    %521 = vmatpush1.xpose.msra.mxu0 0.0
    %522 = vmatprep.subr.mxu0 0.0
    %523 = vmatpush1.xpose.msra.mxu0 0.0
    %524 = vmatprep.subr.mxu0 0.0
    %525 = vmatpush1.xpose.msra.mxu0 0.0
    %526 = vmatprep.subr.mxu0 0.0
    %527 = vmatpush1.xpose.msra.mxu0 0.0
    %528 = vmatprep.subr.mxu0 0.0
    %529 = vmatpush1.xpose.msra.mxu0 0.0
    %530 = vmatprep.subr.mxu0 0.0
    %531 = vmatpush1.xpose.msra.mxu0 0.0
    %532 = vmatprep.subr.mxu0 0.0
    %533 = vmatpush1.xpose.msra.mxu0 0.0
    %534 = vmatprep.subr.mxu0 0.0
    %535 = vmatpush1.xpose.msra.mxu0 0.0
    %536 = vmatprep.subr.mxu0 0.0
    %537 = vmatpush1.xpose.msra.mxu0 0.0
    %538 = vmatprep.subr.mxu0 0.0
    %539 = vmatpush1.xpose.msra.mxu0 0.0
    %540 = vmatprep.subr.mxu0 0.0
    %541 = vmatpush1.xpose.msra.mxu0 0.0
    %542 = vmatprep.subr.mxu0 0.0
    %543 = vmatpush1.xpose.msra.mxu0 0.0
    %544 = vmatprep.subr.mxu0 0.0
    %545 = vmatpush1.xpose.msra.mxu0 0.0
    %546 = vmatprep.subr.mxu0 0.0
    %547 = vmatpush1.xpose.msra.mxu0 0.0
    %548 = vmatprep.subr.mxu0 0.0
    %549 = vmatpush1.xpose.msra.mxu0 0.0
    %550 = vmatprep.subr.mxu0 0.0
    %551 = vmatpush1.xpose.msra.mxu0 0.0
    %552 = vmatprep.subr.mxu0 0.0
    %553 = vmatpush1.xpose.msra.mxu0 0.0
    %554 = vmatprep.subr.mxu0 0.0
    %555 = vmatpush1.xpose.msra.mxu0 0.0
    %556 = vmatprep.subr.mxu0 0.0
    %557 = vmatpush1.xpose.msra.mxu0 0.0
    %558 = vmatprep.subr.mxu0 0.0
    %559 = vmatpush1.xpose.msra.mxu0 0.0
    %560 = vmatprep.subr.mxu0 0.0
    %561 = vmatpush1.xpose.msra.mxu0 0.0
    %562 = vmatprep.subr.mxu0 0.0
    %563 = vmatpush1.xpose.msra.mxu0 0.0
    %564 = vmatprep.subr.mxu0 0.0
    %565 = vmatpush1.xpose.msra.mxu0 0.0
    %566 = vmatprep.subr.mxu0 0.0
    %567 = vmatpush1.xpose.msra.mxu0 0.0
    %568 = vmatprep.subr.mxu0 0.0
    %569 = vmatpush1.xpose.msra.mxu0 0.0
    %570 = vmatprep.subr.mxu0 0.0
    %571 = vmatpush1.xpose.msra.mxu0 0.0
    %572 = vmatprep.subr.mxu0 0.0
    %573 = vmatpush1.xpose.msra.mxu0 0.0
    %574 = vmatprep.mubr.f32.mxu0 0.0
    %575 = vmatmul.mubr.f32.gmra.mrb[0].mxu0 %v504
    %v576 = vpop.f32.mrb[0].mxu0
    %v577 = vadd.f32 0.0, %v576
    %v578 = vpop.f32.mrb[0].mxu0
    %579 = vdwg.mxu0
    %580 = vrot.lane.b32.xlu0 %v195, 32
    %v581 = vpop.permute.xlu0 %580
    %582 = vrot.lane.b32.xlu0 %v314, 32
    %v583 = vpop.permute.xlu0 %582
    %584 = vrot.lane.b32.xlu0 %v320, 32
    %v585 = vpop.permute.xlu0 %584
    %v586 = vsel %vm336, %v581, 0
    %v588 = vsel %vm336, %v583, 0
    %v590 = vsel %vm336, %v585, 0
    %592 = vmatprep.subr.mxu0 0.0
    %593 = vmatpush1.xpose.msra.mxu0 %v588
    %594 = vmatprep.subr.mxu0 0.0
    %595 = vmatpush1.xpose.msra.mxu0 %v590
    %596 = vmatprep.subr.mxu0 0.0
    %597 = vmatpush1.xpose.msra.mxu0 0.0
    %598 = vmatprep.subr.mxu0 0.0
    %599 = vmatpush1.xpose.msra.mxu0 0.0
    %600 = vmatprep.subr.mxu0 0.0
    %601 = vmatpush1.xpose.msra.mxu0 0.0
    %602 = vmatprep.subr.mxu0 0.0
    %603 = vmatpush1.xpose.msra.mxu0 0.0
    %604 = vmatprep.subr.mxu0 0.0
    %605 = vmatpush1.xpose.msra.mxu0 0.0
    %606 = vmatprep.subr.mxu0 0.0
    %607 = vmatpush1.xpose.msra.mxu0 0.0
    %608 = vmatprep.subr.mxu0 0.0
    %609 = vmatpush1.xpose.msra.mxu0 0.0
    %610 = vmatprep.subr.mxu0 0.0
    %611 = vmatpush1.xpose.msra.mxu0 0.0
    %612 = vmatprep.subr.mxu0 0.0
    %613 = vmatpush1.xpose.msra.mxu0 0.0
    %614 = vmatprep.subr.mxu0 0.0
    %615 = vmatpush1.xpose.msra.mxu0 0.0
    %616 = vmatprep.subr.mxu0 0.0
    %617 = vmatpush1.xpose.msra.mxu0 0.0
    %618 = vmatprep.subr.mxu0 0.0
    %619 = vmatpush1.xpose.msra.mxu0 0.0
    %620 = vmatprep.subr.mxu0 0.0
    %621 = vmatpush1.xpose.msra.mxu0 0.0
    %622 = vmatprep.subr.mxu0 0.0
    %623 = vmatpush1.xpose.msra.mxu0 0.0
    %624 = vmatprep.subr.mxu0 0.0
    %625 = vmatpush1.xpose.msra.mxu0 0.0
    %626 = vmatprep.subr.mxu0 0.0
    %627 = vmatpush1.xpose.msra.mxu0 0.0
    %628 = vmatprep.subr.mxu0 0.0
    %629 = vmatpush1.xpose.msra.mxu0 0.0
    %630 = vmatprep.subr.mxu0 0.0
    %631 = vmatpush1.xpose.msra.mxu0 0.0
    %632 = vmatprep.subr.mxu0 0.0
    %633 = vmatpush1.xpose.msra.mxu0 0.0
    %634 = vmatprep.subr.mxu0 0.0
    %635 = vmatpush1.xpose.msra.mxu0 0.0
    %636 = vmatprep.subr.mxu0 0.0
    %637 = vmatpush1.xpose.msra.mxu0 0.0
    %638 = vmatprep.subr.mxu0 0.0
    %639 = vmatpush1.xpose.msra.mxu0 0.0
    %640 = vmatprep.subr.mxu0 0.0
    %641 = vmatpush1.xpose.msra.mxu0 0.0
    %642 = vmatprep.subr.mxu0 0.0
    %643 = vmatpush1.xpose.msra.mxu0 0.0
    %644 = vmatprep.subr.mxu0 0.0
    %645 = vmatpush1.xpose.msra.mxu0 0.0
    %646 = vmatprep.subr.mxu0 0.0
    %647 = vmatpush1.xpose.msra.mxu0 0.0
    %648 = vmatprep.subr.mxu0 0.0
    %649 = vmatpush1.xpose.msra.mxu0 0.0
    %650 = vmatprep.subr.mxu0 0.0
    %651 = vmatpush1.xpose.msra.mxu0 0.0
    %652 = vmatprep.subr.mxu0 0.0
    %653 = vmatpush1.xpose.msra.mxu0 0.0
    %654 = vmatprep.subr.mxu0 0.0
    %655 = vmatpush1.xpose.msra.mxu0 0.0
    %656 = vmatprep.mubr.f32.mxu0 0.0
    %657 = vmatmul.mubr.f32.gmra.mrb[0].mxu0 %v586
    %v658 = vpop.f32.mrb[0].mxu0
    %v659 = vadd.f32 0.0, %v658
    %v660 = vpop.f32.mrb[0].mxu0
    %661 = vdwg.mxu0
    %v663 = vsel %vm336, %v200, 0
    %v666 = vsel %vm336, %v326, 0
    %v669 = vsel %vm336, %v332, 0
    %671 = vmatprep.subr.mxu0 0.0
    %672 = vmatpush1.xpose.msra.mxu0 %v666
    %673 = vmatprep.subr.mxu0 0.0
    %674 = vmatpush1.xpose.msra.mxu0 %v669
    %675 = vmatprep.subr.mxu0 0.0
    %676 = vmatpush1.xpose.msra.mxu0 0.0
    %677 = vmatprep.subr.mxu0 0.0
    %678 = vmatpush1.xpose.msra.mxu0 0.0
    %679 = vmatprep.subr.mxu0 0.0
    %680 = vmatpush1.xpose.msra.mxu0 0.0
    %681 = vmatprep.subr.mxu0 0.0
    %682 = vmatpush1.xpose.msra.mxu0 0.0
    %683 = vmatprep.subr.mxu0 0.0
    %684 = vmatpush1.xpose.msra.mxu0 0.0
    %685 = vmatprep.subr.mxu0 0.0
    %686 = vmatpush1.xpose.msra.mxu0 0.0
    %687 = vmatprep.subr.mxu0 0.0
    %688 = vmatpush1.xpose.msra.mxu0 0.0
    %689 = vmatprep.subr.mxu0 0.0
    %690 = vmatpush1.xpose.msra.mxu0 0.0
    %691 = vmatprep.subr.mxu0 0.0
    %692 = vmatpush1.xpose.msra.mxu0 0.0
    %693 = vmatprep.subr.mxu0 0.0
    %694 = vmatpush1.xpose.msra.mxu0 0.0
    %695 = vmatprep.subr.mxu0 0.0
    %696 = vmatpush1.xpose.msra.mxu0 0.0
    %697 = vmatprep.subr.mxu0 0.0
    %698 = vmatpush1.xpose.msra.mxu0 0.0
    %699 = vmatprep.subr.mxu0 0.0
    %700 = vmatpush1.xpose.msra.mxu0 0.0
    %701 = vmatprep.subr.mxu0 0.0
    %702 = vmatpush1.xpose.msra.mxu0 0.0
    %703 = vmatprep.subr.mxu0 0.0
    %704 = vmatpush1.xpose.msra.mxu0 0.0
    %705 = vmatprep.subr.mxu0 0.0
    %706 = vmatpush1.xpose.msra.mxu0 0.0
    %707 = vmatprep.subr.mxu0 0.0
    %708 = vmatpush1.xpose.msra.mxu0 0.0
    %709 = vmatprep.subr.mxu0 0.0
    %710 = vmatpush1.xpose.msra.mxu0 0.0
    %711 = vmatprep.subr.mxu0 0.0
    %712 = vmatpush1.xpose.msra.mxu0 0.0
    %713 = vmatprep.subr.mxu0 0.0
    %714 = vmatpush1.xpose.msra.mxu0 0.0
    %715 = vmatprep.subr.mxu0 0.0
    %716 = vmatpush1.xpose.msra.mxu0 0.0
    %717 = vmatprep.subr.mxu0 0.0
    %718 = vmatpush1.xpose.msra.mxu0 0.0
    %719 = vmatprep.subr.mxu0 0.0
    %720 = vmatpush1.xpose.msra.mxu0 0.0
    %721 = vmatprep.subr.mxu0 0.0
    %722 = vmatpush1.xpose.msra.mxu0 0.0
    %723 = vmatprep.subr.mxu0 0.0
    %724 = vmatpush1.xpose.msra.mxu0 0.0
    %725 = vmatprep.subr.mxu0 0.0
    %726 = vmatpush1.xpose.msra.mxu0 0.0
    %727 = vmatprep.subr.mxu0 0.0
    %728 = vmatpush1.xpose.msra.mxu0 0.0
    %729 = vmatprep.subr.mxu0 0.0
    %730 = vmatpush1.xpose.msra.mxu0 0.0
    %731 = vmatprep.subr.mxu0 0.0
    %732 = vmatpush1.xpose.msra.mxu0 0.0
    %733 = vmatprep.subr.mxu0 0.0
    %734 = vmatpush1.xpose.msra.mxu0 0.0
    %735 = vmatprep.mubr.f32.mxu0 0.0
    %736 = vmatmul.mubr.f32.gmra.mrb[0].mxu0 %v663
    %v737 = vpop.f32.mrb[0].mxu0
    %v738 = vadd.f32 0.0, %v737
    %v739 = vpop.f32.mrb[0].mxu0
    %740 = vdwg.mxu0
    %741 = vrot.lane.b32.xlu0 %v200, 96
    %v742 = vpop.permute.xlu0 %741
    %743 = vrot.lane.b32.xlu0 %v326, 96
    %v744 = vpop.permute.xlu0 %743
    %745 = vrot.lane.b32.xlu0 %v332, 96
    %v746 = vpop.permute.xlu0 %745
    %v747 = vsel %vm336, %v742, 0
    %v749 = vsel %vm336, %v744, 0
    %v751 = vsel %vm336, %v746, 0
    %753 = vmatprep.subr.mxu0 0.0
    %754 = vmatpush1.xpose.msra.mxu0 %v749
    %755 = vmatprep.subr.mxu0 0.0
    %756 = vmatpush1.xpose.msra.mxu0 %v751
    %757 = vmatprep.subr.mxu0 0.0
    %758 = vmatpush1.xpose.msra.mxu0 0.0
    %759 = vmatprep.subr.mxu0 0.0
    %760 = vmatpush1.xpose.msra.mxu0 0.0
    %761 = vmatprep.subr.mxu0 0.0
    %762 = vmatpush1.xpose.msra.mxu0 0.0
    %763 = vmatprep.subr.mxu0 0.0
    %764 = vmatpush1.xpose.msra.mxu0 0.0
    %765 = vmatprep.subr.mxu0 0.0
    %766 = vmatpush1.xpose.msra.mxu0 0.0
    %767 = vmatprep.subr.mxu0 0.0
    %768 = vmatpush1.xpose.msra.mxu0 0.0
    %769 = vmatprep.subr.mxu0 0.0
    %770 = vmatpush1.xpose.msra.mxu0 0.0
    %771 = vmatprep.subr.mxu0 0.0
    %772 = vmatpush1.xpose.msra.mxu0 0.0
    %773 = vmatprep.subr.mxu0 0.0
    %774 = vmatpush1.xpose.msra.mxu0 0.0
    %775 = vmatprep.subr.mxu0 0.0
    %776 = vmatpush1.xpose.msra.mxu0 0.0
    %777 = vmatprep.subr.mxu0 0.0
    %778 = vmatpush1.xpose.msra.mxu0 0.0
    %779 = vmatprep.subr.mxu0 0.0
    %780 = vmatpush1.xpose.msra.mxu0 0.0
    %781 = vmatprep.subr.mxu0 0.0
    %782 = vmatpush1.xpose.msra.mxu0 0.0
    %783 = vmatprep.subr.mxu0 0.0
    %784 = vmatpush1.xpose.msra.mxu0 0.0
    %785 = vmatprep.subr.mxu0 0.0
    %786 = vmatpush1.xpose.msra.mxu0 0.0
    %787 = vmatprep.subr.mxu0 0.0
    %788 = vmatpush1.xpose.msra.mxu0 0.0
    %789 = vmatprep.subr.mxu0 0.0
    %790 = vmatpush1.xpose.msra.mxu0 0.0
    %791 = vmatprep.subr.mxu0 0.0
    %792 = vmatpush1.xpose.msra.mxu0 0.0
    %793 = vmatprep.subr.mxu0 0.0
    %794 = vmatpush1.xpose.msra.mxu0 0.0
    %795 = vmatprep.subr.mxu0 0.0
    %796 = vmatpush1.xpose.msra.mxu0 0.0
    %797 = vmatprep.subr.mxu0 0.0
    %798 = vmatpush1.xpose.msra.mxu0 0.0
    %799 = vmatprep.subr.mxu0 0.0
    %800 = vmatpush1.xpose.msra.mxu0 0.0
    %801 = vmatprep.subr.mxu0 0.0
    %802 = vmatpush1.xpose.msra.mxu0 0.0
    %803 = vmatprep.subr.mxu0 0.0
    %804 = vmatpush1.xpose.msra.mxu0 0.0
    %805 = vmatprep.subr.mxu0 0.0
    %806 = vmatpush1.xpose.msra.mxu0 0.0
    %807 = vmatprep.subr.mxu0 0.0
    %808 = vmatpush1.xpose.msra.mxu0 0.0
    %809 = vmatprep.subr.mxu0 0.0
    %810 = vmatpush1.xpose.msra.mxu0 0.0
    %811 = vmatprep.subr.mxu0 0.0
    %812 = vmatpush1.xpose.msra.mxu0 0.0
    %813 = vmatprep.subr.mxu0 0.0
    %814 = vmatpush1.xpose.msra.mxu0 0.0
    %815 = vmatprep.subr.mxu0 0.0
    %816 = vmatpush1.xpose.msra.mxu0 0.0
    %817 = vmatprep.mubr.f32.mxu0 0.0
    %818 = vmatmul.mubr.f32.gmra.mrb[0].mxu0 %v747
    %v819 = vpop.f32.mrb[0].mxu0
    %v820 = vadd.f32 0.0, %v819
    %v821 = vpop.f32.mrb[0].mxu0
    %822 = vdwg.mxu0
    %823 = vrot.lane.b32.xlu0 %v200, 64
    %v824 = vpop.permute.xlu0 %823
    %825 = vrot.lane.b32.xlu0 %v326, 64
    %v826 = vpop.permute.xlu0 %825
    %827 = vrot.lane.b32.xlu0 %v332, 64
    %v828 = vpop.permute.xlu0 %827
    %v829 = vsel %vm336, %v824, 0
    %v831 = vsel %vm336, %v826, 0
    %v833 = vsel %vm336, %v828, 0
    %835 = vmatprep.subr.mxu0 0.0
    %836 = vmatpush1.xpose.msra.mxu0 %v831
    %837 = vmatprep.subr.mxu0 0.0
    %838 = vmatpush1.xpose.msra.mxu0 %v833
    %839 = vmatprep.subr.mxu0 0.0
    %840 = vmatpush1.xpose.msra.mxu0 0.0
    %841 = vmatprep.subr.mxu0 0.0
    %842 = vmatpush1.xpose.msra.mxu0 0.0
    %843 = vmatprep.subr.mxu0 0.0
    %844 = vmatpush1.xpose.msra.mxu0 0.0
    %845 = vmatprep.subr.mxu0 0.0
    %846 = vmatpush1.xpose.msra.mxu0 0.0
    %847 = vmatprep.subr.mxu0 0.0
    %848 = vmatpush1.xpose.msra.mxu0 0.0
    %849 = vmatprep.subr.mxu0 0.0
    %850 = vmatpush1.xpose.msra.mxu0 0.0
    %851 = vmatprep.subr.mxu0 0.0
    %852 = vmatpush1.xpose.msra.mxu0 0.0
    %853 = vmatprep.subr.mxu0 0.0
    %854 = vmatpush1.xpose.msra.mxu0 0.0
    %855 = vmatprep.subr.mxu0 0.0
    %856 = vmatpush1.xpose.msra.mxu0 0.0
    %857 = vmatprep.subr.mxu0 0.0
    %858 = vmatpush1.xpose.msra.mxu0 0.0
    %859 = vmatprep.subr.mxu0 0.0
    %860 = vmatpush1.xpose.msra.mxu0 0.0
    %861 = vmatprep.subr.mxu0 0.0
    %862 = vmatpush1.xpose.msra.mxu0 0.0
    %863 = vmatprep.subr.mxu0 0.0
    %864 = vmatpush1.xpose.msra.mxu0 0.0
    %865 = vmatprep.subr.mxu0 0.0
    %866 = vmatpush1.xpose.msra.mxu0 0.0
    %867 = vmatprep.subr.mxu0 0.0
    %868 = vmatpush1.xpose.msra.mxu0 0.0
    %869 = vmatprep.subr.mxu0 0.0
    %870 = vmatpush1.xpose.msra.mxu0 0.0
    %871 = vmatprep.subr.mxu0 0.0
    %872 = vmatpush1.xpose.msra.mxu0 0.0
    %873 = vmatprep.subr.mxu0 0.0
    %874 = vmatpush1.xpose.msra.mxu0 0.0
    %875 = vmatprep.subr.mxu0 0.0
    %876 = vmatpush1.xpose.msra.mxu0 0.0
    %877 = vmatprep.subr.mxu0 0.0
    %878 = vmatpush1.xpose.msra.mxu0 0.0
    %879 = vmatprep.subr.mxu0 0.0
    %880 = vmatpush1.xpose.msra.mxu0 0.0
    %881 = vmatprep.subr.mxu0 0.0
    %882 = vmatpush1.xpose.msra.mxu0 0.0
    %883 = vmatprep.subr.mxu0 0.0
    %884 = vmatpush1.xpose.msra.mxu0 0.0
    %885 = vmatprep.subr.mxu0 0.0
    %886 = vmatpush1.xpose.msra.mxu0 0.0
    %887 = vmatprep.subr.mxu0 0.0
    %888 = vmatpush1.xpose.msra.mxu0 0.0
    %889 = vmatprep.subr.mxu0 0.0
    %890 = vmatpush1.xpose.msra.mxu0 0.0
    %891 = vmatprep.subr.mxu0 0.0
    %892 = vmatpush1.xpose.msra.mxu0 0.0
    %893 = vmatprep.subr.mxu0 0.0
    %894 = vmatpush1.xpose.msra.mxu0 0.0
    %895 = vmatprep.subr.mxu0 0.0
    %896 = vmatpush1.xpose.msra.mxu0 0.0
    %897 = vmatprep.subr.mxu0 0.0
    %898 = vmatpush1.xpose.msra.mxu0 0.0
    %899 = vmatprep.mubr.f32.mxu0 0.0
    %900 = vmatmul.mubr.f32.gmra.mrb[0].mxu0 %v829
    %v901 = vpop.f32.mrb[0].mxu0
    %v902 = vadd.f32 0.0, %v901
    %v903 = vpop.f32.mrb[0].mxu0
    %904 = vdwg.mxu0
    %905 = vrot.lane.b32.xlu0 %v200, 32
    %v906 = vpop.permute.xlu0 %905
    %907 = vrot.lane.b32.xlu0 %v326, 32
    %v908 = vpop.permute.xlu0 %907
    %909 = vrot.lane.b32.xlu0 %v332, 32
    %v910 = vpop.permute.xlu0 %909
    %v911 = vsel %vm336, %v906, 0
    %v913 = vsel %vm336, %v908, 0
    %v915 = vsel %vm336, %v910, 0
    %917 = vmatprep.subr.mxu0 0.0
    %918 = vmatpush1.xpose.msra.mxu0 %v913
    %919 = vmatprep.subr.mxu0 0.0
    %920 = vmatpush1.xpose.msra.mxu0 %v915
    %921 = vmatprep.subr.mxu0 0.0
    %922 = vmatpush1.xpose.msra.mxu0 0.0
    %923 = vmatprep.subr.mxu0 0.0
    %924 = vmatpush1.xpose.msra.mxu0 0.0
    %925 = vmatprep.subr.mxu0 0.0
    %926 = vmatpush1.xpose.msra.mxu0 0.0
    %927 = vmatprep.subr.mxu0 0.0
    %928 = vmatpush1.xpose.msra.mxu0 0.0
    %929 = vmatprep.subr.mxu0 0.0
    %930 = vmatpush1.xpose.msra.mxu0 0.0
    %931 = vmatprep.subr.mxu0 0.0
    %932 = vmatpush1.xpose.msra.mxu0 0.0
    %933 = vmatprep.subr.mxu0 0.0
    %934 = vmatpush1.xpose.msra.mxu0 0.0
    %935 = vmatprep.subr.mxu0 0.0
    %936 = vmatpush1.xpose.msra.mxu0 0.0
    %937 = vmatprep.subr.mxu0 0.0
    %938 = vmatpush1.xpose.msra.mxu0 0.0
    %939 = vmatprep.subr.mxu0 0.0
    %940 = vmatpush1.xpose.msra.mxu0 0.0
    %941 = vmatprep.subr.mxu0 0.0
    %942 = vmatpush1.xpose.msra.mxu0 0.0
    %943 = vmatprep.subr.mxu0 0.0
    %944 = vmatpush1.xpose.msra.mxu0 0.0
    %945 = vmatprep.subr.mxu0 0.0
    %946 = vmatpush1.xpose.msra.mxu0 0.0
    %947 = vmatprep.subr.mxu0 0.0
    %948 = vmatpush1.xpose.msra.mxu0 0.0
    %949 = vmatprep.subr.mxu0 0.0
    %950 = vmatpush1.xpose.msra.mxu0 0.0
    %951 = vmatprep.subr.mxu0 0.0
    %952 = vmatpush1.xpose.msra.mxu0 0.0
    %953 = vmatprep.subr.mxu0 0.0
    %954 = vmatpush1.xpose.msra.mxu0 0.0
    %955 = vmatprep.subr.mxu0 0.0
    %956 = vmatpush1.xpose.msra.mxu0 0.0
    %957 = vmatprep.subr.mxu0 0.0
    %958 = vmatpush1.xpose.msra.mxu0 0.0
    %959 = vmatprep.subr.mxu0 0.0
    %960 = vmatpush1.xpose.msra.mxu0 0.0
    %961 = vmatprep.subr.mxu0 0.0
    %962 = vmatpush1.xpose.msra.mxu0 0.0
    %963 = vmatprep.subr.mxu0 0.0
    %964 = vmatpush1.xpose.msra.mxu0 0.0
    %965 = vmatprep.subr.mxu0 0.0
    %966 = vmatpush1.xpose.msra.mxu0 0.0
    %967 = vmatprep.subr.mxu0 0.0
    %968 = vmatpush1.xpose.msra.mxu0 0.0
    %969 = vmatprep.subr.mxu0 0.0
    %970 = vmatpush1.xpose.msra.mxu0 0.0
    %971 = vmatprep.subr.mxu0 0.0
    %972 = vmatpush1.xpose.msra.mxu0 0.0
    %973 = vmatprep.subr.mxu0 0.0
    %974 = vmatpush1.xpose.msra.mxu0 0.0
    %975 = vmatprep.subr.mxu0 0.0
    %976 = vmatpush1.xpose.msra.mxu0 0.0
    %977 = vmatprep.subr.mxu0 0.0
    %978 = vmatpush1.xpose.msra.mxu0 0.0
    %979 = vmatprep.subr.mxu0 0.0
    %980 = vmatpush1.xpose.msra.mxu0 0.0
    %981 = vmatprep.mubr.f32.mxu0 0.0
    %982 = vmatmul.mubr.f32.gmra.mrb[0].mxu0 %v911
    %v983 = vpop.f32.mrb[0].mxu0
    %v984 = vadd.f32 0.0, %v983
    %v985 = vpop.f32.mrb[0].mxu0
    %986 = vdwg.mxu0
    %v987 = vld [vmem:[%s2] sm:$0x1]
    %v988 = vld [vmem:[%s2 + $0x1] sm:$0x1]
    %v991 = vlaneseq
    %v992 = vshrl.u32 %v991, 7
    %v993 = vsub.s32 0, %v992
    %v994 = vrot.slane %v987, %v993
    %v995 = vlaneseq
    %v996 = vshrl.u32 %v995, 7
    %v997 = vsub.s32 0, %v996
    %v998 = vrot.slane %v988, %v997
    %v1001 = vadd.f32 %v413, %v994
    %v1002 = vadd.f32 %v495, %v994
    %v1003 = vadd.f32 %v577, %v994
    %v1004 = vadd.f32 %v659, %v994
    %v1005 = vadd.f32 %v738, %v998
    %v1006 = vadd.f32 %v820, %v998
    %v1007 = vadd.f32 %v902, %v998
    %v1008 = vadd.f32 %v984, %v998
    %vm1009 = vcmask 130048
    %v1010 = vsel %vm1009, %v1001, -inf
    %1011 = vmax.xlane.f32.xlu0 %v1010
    %v1012 = vpop.xlane.xlu0 %1011
    %v1013 = vsel %vm1009, %v1002, -inf
    %1014 = vmax.xlane.f32.xlu0 %v1013
    %v1015 = vpop.xlane.xlu0 %1014
    %v1016 = vsel %vm1009, %v1003, -inf
    %1017 = vmax.xlane.f32.xlu0 %v1016
    %v1018 = vpop.xlane.xlu0 %1017
    %v1019 = vsel %vm1009, %v1004, -inf
    %1020 = vmax.xlane.f32.xlu0 %v1019
    %v1021 = vpop.xlane.xlu0 %1020
    %v1022 = vsel %vm1009, %v1005, -inf
    %1023 = vmax.xlane.f32.xlu0 %v1022
    %v1024 = vpop.xlane.xlu0 %1023
    %v1025 = vsel %vm1009, %v1006, -inf
    %1026 = vmax.xlane.f32.xlu0 %v1025
    %v1027 = vpop.xlane.xlu0 %1026
    %v1028 = vsel %vm1009, %v1007, -inf
    %1029 = vmax.xlane.f32.xlu0 %v1028
    %v1030 = vpop.xlane.xlu0 %1029
    %v1031 = vsel %vm1009, %v1008, -inf
    %1032 = vmax.xlane.f32.xlu0 %v1031
    %v1033 = vpop.xlane.xlu0 %1032
    %v1034 = vsub.f32 %v1001, %v1012
    %v1035 = vsub.f32 %v1002, %v1015
    %v1036 = vsub.f32 %v1003, %v1018
    %v1037 = vsub.f32 %v1004, %v1021
    %v1038 = vsub.f32 %v1005, %v1024
    %v1039 = vsub.f32 %v1006, %v1027
    %v1040 = vsub.f32 %v1007, %v1030
    %v1041 = vsub.f32 %v1008, %v1033
    %v1042 = vmul.f32 %v1034, 1.442695
    %v1043 = vpow.pop %v1042
    %v1044 = vmul.f32 %v1035, 1.442695
    %v1045 = vpow.pop %v1044
    %v1046 = vmul.f32 %v1036, 1.442695
    %v1047 = vpow.pop %v1046
    %v1048 = vmul.f32 %v1037, 1.442695
    %v1049 = vpow.pop %v1048
    %v1050 = vmul.f32 %v1038, 1.442695
    %v1051 = vpow.pop %v1050
    %v1052 = vmul.f32 %v1039, 1.442695
    %v1053 = vpow.pop %v1052
    %v1054 = vmul.f32 %v1040, 1.442695
    %v1055 = vpow.pop %v1054
    %v1056 = vmul.f32 %v1041, 1.442695
    %v1057 = vpow.pop %v1056
    %v1058 = vsel %vm1009, %v1043, 0.0
    %1059 = vadd.xlane.f32.xlu0 %v1058
    %v1060 = vpop.xlane.xlu0 %1059
    %v1061 = vsel %vm1009, %v1045, 0.0
    %1062 = vadd.xlane.f32.xlu0 %v1061
    %v1063 = vpop.xlane.xlu0 %1062
    %v1064 = vsel %vm1009, %v1047, 0.0
    %1065 = vadd.xlane.f32.xlu0 %v1064
    %v1066 = vpop.xlane.xlu0 %1065
    %v1067 = vsel %vm1009, %v1049, 0.0
    %1068 = vadd.xlane.f32.xlu0 %v1067
    %v1069 = vpop.xlane.xlu0 %1068
    %v1070 = vsel %vm1009, %v1051, 0.0
    %1071 = vadd.xlane.f32.xlu0 %v1070
    %v1072 = vpop.xlane.xlu0 %1071
    %v1073 = vsel %vm1009, %v1053, 0.0
    %1074 = vadd.xlane.f32.xlu0 %v1073
    %v1075 = vpop.xlane.xlu0 %1074
    %v1076 = vsel %vm1009, %v1055, 0.0
    %1077 = vadd.xlane.f32.xlu0 %v1076
    %v1078 = vpop.xlane.xlu0 %1077
    %v1079 = vsel %vm1009, %v1057, 0.0
    %1080 = vadd.xlane.f32.xlu0 %v1079
    %v1081 = vpop.xlane.xlu0 %1080
    %v1082 = vrcp.pop %v1060
    %v1083 = vmul.f32 %v1043, %v1082
    %v1084 = vrcp.pop %v1063
    %v1085 = vmul.f32 %v1045, %v1084
    %v1086 = vrcp.pop %v1066
    %v1087 = vmul.f32 %v1047, %v1086
    %v1088 = vrcp.pop %v1069
    %v1089 = vmul.f32 %v1049, %v1088
    %v1090 = vrcp.pop %v1072
    %v1091 = vmul.f32 %v1051, %v1090
    %v1092 = vrcp.pop %v1075
    %v1093 = vmul.f32 %v1053, %v1092
    %v1094 = vrcp.pop %v1078
    %v1095 = vmul.f32 %v1055, %v1094
    %v1096 = vrcp.pop %v1081
    %v1097 = vmul.f32 %v1057, %v1096
    %v1099 = vsel %vm1009, %v1083, 0
    %1101 = vmatprep.subr.mxu0 0.0
    %1102 = vmatpush1.msra.mxu0 %v316
    %1103 = vmatprep.subr.mxu0 0.0
    %1104 = vmatpush1.msra.mxu0 %v322
    %1105 = vmatprep.subr.mxu0 0.0
    %1106 = vmatpush1.msra.mxu0 0.0
    %1107 = vmatprep.subr.mxu0 0.0
    %1108 = vmatpush1.msra.mxu0 0.0
    %1109 = vmatprep.subr.mxu0 0.0
    %1110 = vmatpush1.msra.mxu0 0.0
    %1111 = vmatprep.subr.mxu0 0.0
    %1112 = vmatpush1.msra.mxu0 0.0
    %1113 = vmatprep.subr.mxu0 0.0
    %1114 = vmatpush1.msra.mxu0 0.0
    %1115 = vmatprep.subr.mxu0 0.0
    %1116 = vmatpush1.msra.mxu0 0.0
    %1117 = vmatprep.subr.mxu0 0.0
    %1118 = vmatpush1.msra.mxu0 0.0
    %1119 = vmatprep.subr.mxu0 0.0
    %1120 = vmatpush1.msra.mxu0 0.0
    %1121 = vmatprep.subr.mxu0 0.0
    %1122 = vmatpush1.msra.mxu0 0.0
    %1123 = vmatprep.subr.mxu0 0.0
    %1124 = vmatpush1.msra.mxu0 0.0
    %1125 = vmatprep.subr.mxu0 0.0
    %1126 = vmatpush1.msra.mxu0 0.0
    %1127 = vmatprep.subr.mxu0 0.0
    %1128 = vmatpush1.msra.mxu0 0.0
    %1129 = vmatprep.subr.mxu0 0.0
    %1130 = vmatpush1.msra.mxu0 0.0
    %1131 = vmatprep.subr.mxu0 0.0
    %1132 = vmatpush1.msra.mxu0 0.0
    %1133 = vmatprep.subr.mxu0 0.0
    %1134 = vmatpush1.msra.mxu0 0.0
    %1135 = vmatprep.subr.mxu0 0.0
    %1136 = vmatpush1.msra.mxu0 0.0
    %1137 = vmatprep.subr.mxu0 0.0
    %1138 = vmatpush1.msra.mxu0 0.0
    %1139 = vmatprep.subr.mxu0 0.0
    %1140 = vmatpush1.msra.mxu0 0.0
    %1141 = vmatprep.subr.mxu0 0.0
    %1142 = vmatpush1.msra.mxu0 0.0
    %1143 = vmatprep.subr.mxu0 0.0
    %1144 = vmatpush1.msra.mxu0 0.0
    %1145 = vmatprep.subr.mxu0 0.0
    %1146 = vmatpush1.msra.mxu0 0.0
    %1147 = vmatprep.subr.mxu0 0.0
    %1148 = vmatpush1.msra.mxu0 0.0
    %1149 = vmatprep.subr.mxu0 0.0
    %1150 = vmatpush1.msra.mxu0 0.0
    %1151 = vmatprep.subr.mxu0 0.0
    %1152 = vmatpush1.msra.mxu0 0.0
    %1153 = vmatprep.subr.mxu0 0.0
    %1154 = vmatpush1.msra.mxu0 0.0
    %1155 = vmatprep.subr.mxu0 0.0
    %1156 = vmatpush1.msra.mxu0 0.0
    %1157 = vmatprep.subr.mxu0 0.0
    %1158 = vmatpush1.msra.mxu0 0.0
    %1159 = vmatprep.subr.mxu0 0.0
    %1160 = vmatpush1.msra.mxu0 0.0
    %1161 = vmatprep.subr.mxu0 0.0
    %1162 = vmatpush1.msra.mxu0 0.0
    %1163 = vmatprep.subr.mxu0 0.0
    %1164 = vmatpush1.msra.mxu0 0.0
    %1165 = vmatprep.mubr.f32.mxu0 0.0
    %1166 = vmatmul.mubr.f32.gmra.mrb[0].mxu0 %v1099
    %v1167 = vpop.f32.mrb[0].mxu0
    %v1168 = vadd.f32 0.0, %v1167
    %v1169 = vpop.f32.mrb[0].mxu0
    %1170 = vdwg.mxu0
    %1173 = vrot.lane.b32.xlu0 %v316, 96
    %v1174 = vpop.permute.xlu0 %1173
    %1175 = vrot.lane.b32.xlu0 %v322, 96
    %v1176 = vpop.permute.xlu0 %1175
    %v1180 = vsel %vm1009, %v1085, 0
    %1182 = vmatprep.subr.mxu0 0.0
    %1183 = vmatpush1.msra.mxu0 %v1174
    %1184 = vmatprep.subr.mxu0 0.0
    %1185 = vmatpush1.msra.mxu0 %v1176
    %1186 = vmatprep.subr.mxu0 0.0
    %1187 = vmatpush1.msra.mxu0 0.0
    %1188 = vmatprep.subr.mxu0 0.0
    %1189 = vmatpush1.msra.mxu0 0.0
    %1190 = vmatprep.subr.mxu0 0.0
    %1191 = vmatpush1.msra.mxu0 0.0
    %1192 = vmatprep.subr.mxu0 0.0
    %1193 = vmatpush1.msra.mxu0 0.0
    %1194 = vmatprep.subr.mxu0 0.0
    %1195 = vmatpush1.msra.mxu0 0.0
    %1196 = vmatprep.subr.mxu0 0.0
    %1197 = vmatpush1.msra.mxu0 0.0
    %1198 = vmatprep.subr.mxu0 0.0
    %1199 = vmatpush1.msra.mxu0 0.0
    %1200 = vmatprep.subr.mxu0 0.0
    %1201 = vmatpush1.msra.mxu0 0.0
    %1202 = vmatprep.subr.mxu0 0.0
    %1203 = vmatpush1.msra.mxu0 0.0
    %1204 = vmatprep.subr.mxu0 0.0
    %1205 = vmatpush1.msra.mxu0 0.0
    %1206 = vmatprep.subr.mxu0 0.0
    %1207 = vmatpush1.msra.mxu0 0.0
    %1208 = vmatprep.subr.mxu0 0.0
    %1209 = vmatpush1.msra.mxu0 0.0
    %1210 = vmatprep.subr.mxu0 0.0
    %1211 = vmatpush1.msra.mxu0 0.0
    %1212 = vmatprep.subr.mxu0 0.0
    %1213 = vmatpush1.msra.mxu0 0.0
    %1214 = vmatprep.subr.mxu0 0.0
    %1215 = vmatpush1.msra.mxu0 0.0
    %1216 = vmatprep.subr.mxu0 0.0
    %1217 = vmatpush1.msra.mxu0 0.0
    %1218 = vmatprep.subr.mxu0 0.0
    %1219 = vmatpush1.msra.mxu0 0.0
    %1220 = vmatprep.subr.mxu0 0.0
    %1221 = vmatpush1.msra.mxu0 0.0
    %1222 = vmatprep.subr.mxu0 0.0
    %1223 = vmatpush1.msra.mxu0 0.0
    %1224 = vmatprep.subr.mxu0 0.0
    %1225 = vmatpush1.msra.mxu0 0.0
    %1226 = vmatprep.subr.mxu0 0.0
    %1227 = vmatpush1.msra.mxu0 0.0
    %1228 = vmatprep.subr.mxu0 0.0
    %1229 = vmatpush1.msra.mxu0 0.0
    %1230 = vmatprep.subr.mxu0 0.0
    %1231 = vmatpush1.msra.mxu0 0.0
    %1232 = vmatprep.subr.mxu0 0.0
    %1233 = vmatpush1.msra.mxu0 0.0
    %1234 = vmatprep.subr.mxu0 0.0
    %1235 = vmatpush1.msra.mxu0 0.0
    %1236 = vmatprep.subr.mxu0 0.0
    %1237 = vmatpush1.msra.mxu0 0.0
    %1238 = vmatprep.subr.mxu0 0.0
    %1239 = vmatpush1.msra.mxu0 0.0
    %1240 = vmatprep.subr.mxu0 0.0
    %1241 = vmatpush1.msra.mxu0 0.0
    %1242 = vmatprep.subr.mxu0 0.0
    %1243 = vmatpush1.msra.mxu0 0.0
    %1244 = vmatprep.subr.mxu0 0.0
    %1245 = vmatpush1.msra.mxu0 0.0
    %1246 = vmatprep.mubr.f32.mxu0 0.0
    %1247 = vmatmul.mubr.f32.gmra.mrb[0].mxu0 %v1180
    %v1248 = vpop.f32.mrb[0].mxu0
    %v1249 = vadd.f32 0.0, %v1248
    %v1250 = vpop.f32.mrb[0].mxu0
    %1251 = vdwg.mxu0
    %1252 = vrot.lane.b32.xlu0 %v316, 64
    %v1253 = vpop.permute.xlu0 %1252
    %1254 = vrot.lane.b32.xlu0 %v322, 64
    %v1255 = vpop.permute.xlu0 %1254
    %v1259 = vsel %vm1009, %v1087, 0
    %1261 = vmatprep.subr.mxu0 0.0
    %1262 = vmatpush1.msra.mxu0 %v1253
    %1263 = vmatprep.subr.mxu0 0.0
    %1264 = vmatpush1.msra.mxu0 %v1255
    %1265 = vmatprep.subr.mxu0 0.0
    %1266 = vmatpush1.msra.mxu0 0.0
    %1267 = vmatprep.subr.mxu0 0.0
    %1268 = vmatpush1.msra.mxu0 0.0
    %1269 = vmatprep.subr.mxu0 0.0
    %1270 = vmatpush1.msra.mxu0 0.0
    %1271 = vmatprep.subr.mxu0 0.0
    %1272 = vmatpush1.msra.mxu0 0.0
    %1273 = vmatprep.subr.mxu0 0.0
    %1274 = vmatpush1.msra.mxu0 0.0
    %1275 = vmatprep.subr.mxu0 0.0
    %1276 = vmatpush1.msra.mxu0 0.0
    %1277 = vmatprep.subr.mxu0 0.0
    %1278 = vmatpush1.msra.mxu0 0.0
    %1279 = vmatprep.subr.mxu0 0.0
    %1280 = vmatpush1.msra.mxu0 0.0
    %1281 = vmatprep.subr.mxu0 0.0
    %1282 = vmatpush1.msra.mxu0 0.0
    %1283 = vmatprep.subr.mxu0 0.0
    %1284 = vmatpush1.msra.mxu0 0.0
    %1285 = vmatprep.subr.mxu0 0.0
    %1286 = vmatpush1.msra.mxu0 0.0
    %1287 = vmatprep.subr.mxu0 0.0
    %1288 = vmatpush1.msra.mxu0 0.0
    %1289 = vmatprep.subr.mxu0 0.0
    %1290 = vmatpush1.msra.mxu0 0.0
    %1291 = vmatprep.subr.mxu0 0.0
    %1292 = vmatpush1.msra.mxu0 0.0
    %1293 = vmatprep.subr.mxu0 0.0
    %1294 = vmatpush1.msra.mxu0 0.0
    %1295 = vmatprep.subr.mxu0 0.0
    %1296 = vmatpush1.msra.mxu0 0.0
    %1297 = vmatprep.subr.mxu0 0.0
    %1298 = vmatpush1.msra.mxu0 0.0
    %1299 = vmatprep.subr.mxu0 0.0
    %1300 = vmatpush1.msra.mxu0 0.0
    %1301 = vmatprep.subr.mxu0 0.0
    %1302 = vmatpush1.msra.mxu0 0.0
    %1303 = vmatprep.subr.mxu0 0.0
    %1304 = vmatpush1.msra.mxu0 0.0
    %1305 = vmatprep.subr.mxu0 0.0
    %1306 = vmatpush1.msra.mxu0 0.0
    %1307 = vmatprep.subr.mxu0 0.0
    %1308 = vmatpush1.msra.mxu0 0.0
    %1309 = vmatprep.subr.mxu0 0.0
    %1310 = vmatpush1.msra.mxu0 0.0
    %1311 = vmatprep.subr.mxu0 0.0
    %1312 = vmatpush1.msra.mxu0 0.0
    %1313 = vmatprep.subr.mxu0 0.0
    %1314 = vmatpush1.msra.mxu0 0.0
    %1315 = vmatprep.subr.mxu0 0.0
    %1316 = vmatpush1.msra.mxu0 0.0
    %1317 = vmatprep.subr.mxu0 0.0
    %1318 = vmatpush1.msra.mxu0 0.0
    %1319 = vmatprep.subr.mxu0 0.0
    %1320 = vmatpush1.msra.mxu0 0.0
    %1321 = vmatprep.subr.mxu0 0.0
    %1322 = vmatpush1.msra.mxu0 0.0
    %1323 = vmatprep.subr.mxu0 0.0
    %1324 = vmatpush1.msra.mxu0 0.0
    %1325 = vmatprep.mubr.f32.mxu0 0.0
    %1326 = vmatmul.mubr.f32.gmra.mrb[0].mxu0 %v1259
    %v1327 = vpop.f32.mrb[0].mxu0
    %v1328 = vadd.f32 0.0, %v1327
    %v1329 = vpop.f32.mrb[0].mxu0
    %1330 = vdwg.mxu0
    %1331 = vrot.lane.b32.xlu0 %v316, 32
    %v1332 = vpop.permute.xlu0 %1331
    %1333 = vrot.lane.b32.xlu0 %v322, 32
    %v1334 = vpop.permute.xlu0 %1333
    %v1338 = vsel %vm1009, %v1089, 0
    %1340 = vmatprep.subr.mxu0 0.0
    %1341 = vmatpush1.msra.mxu0 %v1332
    %1342 = vmatprep.subr.mxu0 0.0
    %1343 = vmatpush1.msra.mxu0 %v1334
    %1344 = vmatprep.subr.mxu0 0.0
    %1345 = vmatpush1.msra.mxu0 0.0
    %1346 = vmatprep.subr.mxu0 0.0
    %1347 = vmatpush1.msra.mxu0 0.0
    %1348 = vmatprep.subr.mxu0 0.0
    %1349 = vmatpush1.msra.mxu0 0.0
    %1350 = vmatprep.subr.mxu0 0.0
    %1351 = vmatpush1.msra.mxu0 0.0
    %1352 = vmatprep.subr.mxu0 0.0
    %1353 = vmatpush1.msra.mxu0 0.0
    %1354 = vmatprep.subr.mxu0 0.0
    %1355 = vmatpush1.msra.mxu0 0.0
    %1356 = vmatprep.subr.mxu0 0.0
    %1357 = vmatpush1.msra.mxu0 0.0
    %1358 = vmatprep.subr.mxu0 0.0
    %1359 = vmatpush1.msra.mxu0 0.0
    %1360 = vmatprep.subr.mxu0 0.0
    %1361 = vmatpush1.msra.mxu0 0.0
    %1362 = vmatprep.subr.mxu0 0.0
    %1363 = vmatpush1.msra.mxu0 0.0
    %1364 = vmatprep.subr.mxu0 0.0
    %1365 = vmatpush1.msra.mxu0 0.0
    %1366 = vmatprep.subr.mxu0 0.0
    %1367 = vmatpush1.msra.mxu0 0.0
    %1368 = vmatprep.subr.mxu0 0.0
    %1369 = vmatpush1.msra.mxu0 0.0
    %1370 = vmatprep.subr.mxu0 0.0
    %1371 = vmatpush1.msra.mxu0 0.0
    %1372 = vmatprep.subr.mxu0 0.0
    %1373 = vmatpush1.msra.mxu0 0.0
    %1374 = vmatprep.subr.mxu0 0.0
    %1375 = vmatpush1.msra.mxu0 0.0
    %1376 = vmatprep.subr.mxu0 0.0
    %1377 = vmatpush1.msra.mxu0 0.0
    %1378 = vmatprep.subr.mxu0 0.0
    %1379 = vmatpush1.msra.mxu0 0.0
    %1380 = vmatprep.subr.mxu0 0.0
    %1381 = vmatpush1.msra.mxu0 0.0
    %1382 = vmatprep.subr.mxu0 0.0
    %1383 = vmatpush1.msra.mxu0 0.0
    %1384 = vmatprep.subr.mxu0 0.0
    %1385 = vmatpush1.msra.mxu0 0.0
    %1386 = vmatprep.subr.mxu0 0.0
    %1387 = vmatpush1.msra.mxu0 0.0
    %1388 = vmatprep.subr.mxu0 0.0
    %1389 = vmatpush1.msra.mxu0 0.0
    %1390 = vmatprep.subr.mxu0 0.0
    %1391 = vmatpush1.msra.mxu0 0.0
    %1392 = vmatprep.subr.mxu0 0.0
    %1393 = vmatpush1.msra.mxu0 0.0
    %1394 = vmatprep.subr.mxu0 0.0
    %1395 = vmatpush1.msra.mxu0 0.0
    %1396 = vmatprep.subr.mxu0 0.0
    %1397 = vmatpush1.msra.mxu0 0.0
    %1398 = vmatprep.subr.mxu0 0.0
    %1399 = vmatpush1.msra.mxu0 0.0
    %1400 = vmatprep.subr.mxu0 0.0
    %1401 = vmatpush1.msra.mxu0 0.0
    %1402 = vmatprep.subr.mxu0 0.0
    %1403 = vmatpush1.msra.mxu0 0.0
    %1404 = vmatprep.mubr.f32.mxu0 0.0
    %1405 = vmatmul.mubr.f32.gmra.mrb[0].mxu0 %v1338
    %v1406 = vpop.f32.mrb[0].mxu0
    %v1407 = vadd.f32 0.0, %v1406
    %v1408 = vpop.f32.mrb[0].mxu0
    %1409 = vdwg.mxu0
    %1411 = vrot.lane.b32.xlu0 %v1249, 32
    %v1412 = vpop.permute.xlu0 %1411
    %1415 = vrot.lane.b32.xlu0 %v1328, 64
    %v1416 = vpop.permute.xlu0 %1415
    %1419 = vrot.lane.b32.xlu0 %v1407, 96
    %v1420 = vpop.permute.xlu0 %1419
    %v1422 = vsel %vm336, %v1168, %v1412
    %vm1423 = vcmask 523264
    %v1424 = vsel %vm1423, %v1422, %v1416
    %vm1425 = vcmask 785408
    %v1426 = vsel %vm1425, %v1424, %v1420
    %v1428 = vsel %vm1009, %v1091, 0
    %1430 = vmatprep.subr.mxu0 0.0
    %1431 = vmatpush1.msra.mxu0 %v328
    %1432 = vmatprep.subr.mxu0 0.0
    %1433 = vmatpush1.msra.mxu0 %v334
    %1434 = vmatprep.subr.mxu0 0.0
    %1435 = vmatpush1.msra.mxu0 0.0
    %1436 = vmatprep.subr.mxu0 0.0
    %1437 = vmatpush1.msra.mxu0 0.0
    %1438 = vmatprep.subr.mxu0 0.0
    %1439 = vmatpush1.msra.mxu0 0.0
    %1440 = vmatprep.subr.mxu0 0.0
    %1441 = vmatpush1.msra.mxu0 0.0
    %1442 = vmatprep.subr.mxu0 0.0
    %1443 = vmatpush1.msra.mxu0 0.0
    %1444 = vmatprep.subr.mxu0 0.0
    %1445 = vmatpush1.msra.mxu0 0.0
    %1446 = vmatprep.subr.mxu0 0.0
    %1447 = vmatpush1.msra.mxu0 0.0
    %1448 = vmatprep.subr.mxu0 0.0
    %1449 = vmatpush1.msra.mxu0 0.0
    %1450 = vmatprep.subr.mxu0 0.0
    %1451 = vmatpush1.msra.mxu0 0.0
    %1452 = vmatprep.subr.mxu0 0.0
    %1453 = vmatpush1.msra.mxu0 0.0
    %1454 = vmatprep.subr.mxu0 0.0
    %1455 = vmatpush1.msra.mxu0 0.0
    %1456 = vmatprep.subr.mxu0 0.0
    %1457 = vmatpush1.msra.mxu0 0.0
    %1458 = vmatprep.subr.mxu0 0.0
    %1459 = vmatpush1.msra.mxu0 0.0
    %1460 = vmatprep.subr.mxu0 0.0
    %1461 = vmatpush1.msra.mxu0 0.0
    %1462 = vmatprep.subr.mxu0 0.0
    %1463 = vmatpush1.msra.mxu0 0.0
    %1464 = vmatprep.subr.mxu0 0.0
    %1465 = vmatpush1.msra.mxu0 0.0
    %1466 = vmatprep.subr.mxu0 0.0
    %1467 = vmatpush1.msra.mxu0 0.0
    %1468 = vmatprep.subr.mxu0 0.0
    %1469 = vmatpush1.msra.mxu0 0.0
    %1470 = vmatprep.subr.mxu0 0.0
    %1471 = vmatpush1.msra.mxu0 0.0
    %1472 = vmatprep.subr.mxu0 0.0
    %1473 = vmatpush1.msra.mxu0 0.0
    %1474 = vmatprep.subr.mxu0 0.0
    %1475 = vmatpush1.msra.mxu0 0.0
    %1476 = vmatprep.subr.mxu0 0.0
    %1477 = vmatpush1.msra.mxu0 0.0
    %1478 = vmatprep.subr.mxu0 0.0
    %1479 = vmatpush1.msra.mxu0 0.0
    %1480 = vmatprep.subr.mxu0 0.0
    %1481 = vmatpush1.msra.mxu0 0.0
    %1482 = vmatprep.subr.mxu0 0.0
    %1483 = vmatpush1.msra.mxu0 0.0
    %1484 = vmatprep.subr.mxu0 0.0
    %1485 = vmatpush1.msra.mxu0 0.0
    %1486 = vmatprep.subr.mxu0 0.0
    %1487 = vmatpush1.msra.mxu0 0.0
    %1488 = vmatprep.subr.mxu0 0.0
    %1489 = vmatpush1.msra.mxu0 0.0
    %1490 = vmatprep.subr.mxu0 0.0
    %1491 = vmatpush1.msra.mxu0 0.0
    %1492 = vmatprep.subr.mxu0 0.0
    %1493 = vmatpush1.msra.mxu0 0.0
    %1494 = vmatprep.mubr.f32.mxu0 0.0
    %1495 = vmatmul.mubr.f32.gmra.mrb[0].mxu0 %v1428
    %v1496 = vpop.f32.mrb[0].mxu0
    %v1497 = vadd.f32 0.0, %v1496
    %v1498 = vpop.f32.mrb[0].mxu0
    %1499 = vdwg.mxu0
    %1502 = vrot.lane.b32.xlu0 %v328, 96
    %v1503 = vpop.permute.xlu0 %1502
    %1504 = vrot.lane.b32.xlu0 %v334, 96
    %v1505 = vpop.permute.xlu0 %1504
    %v1509 = vsel %vm1009, %v1093, 0
    %1511 = vmatprep.subr.mxu0 0.0
    %1512 = vmatpush1.msra.mxu0 %v1503
    %1513 = vmatprep.subr.mxu0 0.0
    %1514 = vmatpush1.msra.mxu0 %v1505
    %1515 = vmatprep.subr.mxu0 0.0
    %1516 = vmatpush1.msra.mxu0 0.0
    %1517 = vmatprep.subr.mxu0 0.0
    %1518 = vmatpush1.msra.mxu0 0.0
    %1519 = vmatprep.subr.mxu0 0.0
    %1520 = vmatpush1.msra.mxu0 0.0
    %1521 = vmatprep.subr.mxu0 0.0
    %1522 = vmatpush1.msra.mxu0 0.0
    %1523 = vmatprep.subr.mxu0 0.0
    %1524 = vmatpush1.msra.mxu0 0.0
    %1525 = vmatprep.subr.mxu0 0.0
    %1526 = vmatpush1.msra.mxu0 0.0
    %1527 = vmatprep.subr.mxu0 0.0
    %1528 = vmatpush1.msra.mxu0 0.0
    %1529 = vmatprep.subr.mxu0 0.0
    %1530 = vmatpush1.msra.mxu0 0.0
    %1531 = vmatprep.subr.mxu0 0.0
    %1532 = vmatpush1.msra.mxu0 0.0
    %1533 = vmatprep.subr.mxu0 0.0
    %1534 = vmatpush1.msra.mxu0 0.0
    %1535 = vmatprep.subr.mxu0 0.0
    %1536 = vmatpush1.msra.mxu0 0.0
    %1537 = vmatprep.subr.mxu0 0.0
    %1538 = vmatpush1.msra.mxu0 0.0
    %1539 = vmatprep.subr.mxu0 0.0
    %1540 = vmatpush1.msra.mxu0 0.0
    %1541 = vmatprep.subr.mxu0 0.0
    %1542 = vmatpush1.msra.mxu0 0.0
    %1543 = vmatprep.subr.mxu0 0.0
    %1544 = vmatpush1.msra.mxu0 0.0
    %1545 = vmatprep.subr.mxu0 0.0
    %1546 = vmatpush1.msra.mxu0 0.0
    %1547 = vmatprep.subr.mxu0 0.0
    %1548 = vmatpush1.msra.mxu0 0.0
    %1549 = vmatprep.subr.mxu0 0.0
    %1550 = vmatpush1.msra.mxu0 0.0
    %1551 = vmatprep.subr.mxu0 0.0
    %1552 = vmatpush1.msra.mxu0 0.0
    %1553 = vmatprep.subr.mxu0 0.0
    %1554 = vmatpush1.msra.mxu0 0.0
    %1555 = vmatprep.subr.mxu0 0.0
    %1556 = vmatpush1.msra.mxu0 0.0
    %1557 = vmatprep.subr.mxu0 0.0
    %1558 = vmatpush1.msra.mxu0 0.0
    %1559 = vmatprep.subr.mxu0 0.0
    %1560 = vmatpush1.msra.mxu0 0.0
    %1561 = vmatprep.subr.mxu0 0.0
    %1562 = vmatpush1.msra.mxu0 0.0
    %1563 = vmatprep.subr.mxu0 0.0
    %1564 = vmatpush1.msra.mxu0 0.0
    %1565 = vmatprep.subr.mxu0 0.0
    %1566 = vmatpush1.msra.mxu0 0.0
    %1567 = vmatprep.subr.mxu0 0.0
    %1568 = vmatpush1.msra.mxu0 0.0
    %1569 = vmatprep.subr.mxu0 0.0
    %1570 = vmatpush1.msra.mxu0 0.0
    %1571 = vmatprep.subr.mxu0 0.0
    %1572 = vmatpush1.msra.mxu0 0.0
    %1573 = vmatprep.subr.mxu0 0.0
    %1574 = vmatpush1.msra.mxu0 0.0
    %1575 = vmatprep.mubr.f32.mxu0 0.0
    %1576 = vmatmul.mubr.f32.gmra.mrb[0].mxu0 %v1509
    %v1577 = vpop.f32.mrb[0].mxu0
    %v1578 = vadd.f32 0.0, %v1577
    %v1579 = vpop.f32.mrb[0].mxu0
    %1580 = vdwg.mxu0
    %1581 = vrot.lane.b32.xlu0 %v328, 64
    %v1582 = vpop.permute.xlu0 %1581
    %1583 = vrot.lane.b32.xlu0 %v334, 64
    %v1584 = vpop.permute.xlu0 %1583
    %v1588 = vsel %vm1009, %v1095, 0
    %1590 = vmatprep.subr.mxu0 0.0
    %1591 = vmatpush1.msra.mxu0 %v1582
    %1592 = vmatprep.subr.mxu0 0.0
    %1593 = vmatpush1.msra.mxu0 %v1584
    %1594 = vmatprep.subr.mxu0 0.0
    %1595 = vmatpush1.msra.mxu0 0.0
    %1596 = vmatprep.subr.mxu0 0.0
    %1597 = vmatpush1.msra.mxu0 0.0
    %1598 = vmatprep.subr.mxu0 0.0
    %1599 = vmatpush1.msra.mxu0 0.0
    %1600 = vmatprep.subr.mxu0 0.0
    %1601 = vmatpush1.msra.mxu0 0.0
    %1602 = vmatprep.subr.mxu0 0.0
    %1603 = vmatpush1.msra.mxu0 0.0
    %1604 = vmatprep.subr.mxu0 0.0
    %1605 = vmatpush1.msra.mxu0 0.0
    %1606 = vmatprep.subr.mxu0 0.0
    %1607 = vmatpush1.msra.mxu0 0.0
    %1608 = vmatprep.subr.mxu0 0.0
    %1609 = vmatpush1.msra.mxu0 0.0
    %1610 = vmatprep.subr.mxu0 0.0
    %1611 = vmatpush1.msra.mxu0 0.0
    %1612 = vmatprep.subr.mxu0 0.0
    %1613 = vmatpush1.msra.mxu0 0.0
    %1614 = vmatprep.subr.mxu0 0.0
    %1615 = vmatpush1.msra.mxu0 0.0
    %1616 = vmatprep.subr.mxu0 0.0
    %1617 = vmatpush1.msra.mxu0 0.0
    %1618 = vmatprep.subr.mxu0 0.0
    %1619 = vmatpush1.msra.mxu0 0.0
    %1620 = vmatprep.subr.mxu0 0.0
    %1621 = vmatpush1.msra.mxu0 0.0
    %1622 = vmatprep.subr.mxu0 0.0
    %1623 = vmatpush1.msra.mxu0 0.0
    %1624 = vmatprep.subr.mxu0 0.0
    %1625 = vmatpush1.msra.mxu0 0.0
    %1626 = vmatprep.subr.mxu0 0.0
    %1627 = vmatpush1.msra.mxu0 0.0
    %1628 = vmatprep.subr.mxu0 0.0
    %1629 = vmatpush1.msra.mxu0 0.0
    %1630 = vmatprep.subr.mxu0 0.0
    %1631 = vmatpush1.msra.mxu0 0.0
    %1632 = vmatprep.subr.mxu0 0.0
    %1633 = vmatpush1.msra.mxu0 0.0
    %1634 = vmatprep.subr.mxu0 0.0
    %1635 = vmatpush1.msra.mxu0 0.0
    %1636 = vmatprep.subr.mxu0 0.0
    %1637 = vmatpush1.msra.mxu0 0.0
    %1638 = vmatprep.subr.mxu0 0.0
    %1639 = vmatpush1.msra.mxu0 0.0
    %1640 = vmatprep.subr.mxu0 0.0
    %1641 = vmatpush1.msra.mxu0 0.0
    %1642 = vmatprep.subr.mxu0 0.0
    %1643 = vmatpush1.msra.mxu0 0.0
    %1644 = vmatprep.subr.mxu0 0.0
    %1645 = vmatpush1.msra.mxu0 0.0
    %1646 = vmatprep.subr.mxu0 0.0
    %1647 = vmatpush1.msra.mxu0 0.0
    %1648 = vmatprep.subr.mxu0 0.0
    %1649 = vmatpush1.msra.mxu0 0.0
    %1650 = vmatprep.subr.mxu0 0.0
    %1651 = vmatpush1.msra.mxu0 0.0
    %1652 = vmatprep.subr.mxu0 0.0
    %1653 = vmatpush1.msra.mxu0 0.0
    %1654 = vmatprep.mubr.f32.mxu0 0.0
    %1655 = vmatmul.mubr.f32.gmra.mrb[0].mxu0 %v1588
    %v1656 = vpop.f32.mrb[0].mxu0
    %v1657 = vadd.f32 0.0, %v1656
    %v1658 = vpop.f32.mrb[0].mxu0
    %1659 = vdwg.mxu0
    %1660 = vrot.lane.b32.xlu0 %v328, 32
    %v1661 = vpop.permute.xlu0 %1660
    %1662 = vrot.lane.b32.xlu0 %v334, 32
    %v1663 = vpop.permute.xlu0 %1662
    %v1667 = vsel %vm1009, %v1097, 0
    %1669 = vmatprep.subr.mxu0 0.0
    %1670 = vmatpush1.msra.mxu0 %v1661
    %1671 = vmatprep.subr.mxu0 0.0
    %1672 = vmatpush1.msra.mxu0 %v1663
    %1673 = vmatprep.subr.mxu0 0.0
    %1674 = vmatpush1.msra.mxu0 0.0
    %1675 = vmatprep.subr.mxu0 0.0
    %1676 = vmatpush1.msra.mxu0 0.0
    %1677 = vmatprep.subr.mxu0 0.0
    %1678 = vmatpush1.msra.mxu0 0.0
    %1679 = vmatprep.subr.mxu0 0.0
    %1680 = vmatpush1.msra.mxu0 0.0
    %1681 = vmatprep.subr.mxu0 0.0
    %1682 = vmatpush1.msra.mxu0 0.0
    %1683 = vmatprep.subr.mxu0 0.0
    %1684 = vmatpush1.msra.mxu0 0.0
    %1685 = vmatprep.subr.mxu0 0.0
    %1686 = vmatpush1.msra.mxu0 0.0
    %1687 = vmatprep.subr.mxu0 0.0
    %1688 = vmatpush1.msra.mxu0 0.0
    %1689 = vmatprep.subr.mxu0 0.0
    %1690 = vmatpush1.msra.mxu0 0.0
    %1691 = vmatprep.subr.mxu0 0.0
    %1692 = vmatpush1.msra.mxu0 0.0
    %1693 = vmatprep.subr.mxu0 0.0
    %1694 = vmatpush1.msra.mxu0 0.0
    %1695 = vmatprep.subr.mxu0 0.0
    %1696 = vmatpush1.msra.mxu0 0.0
    %1697 = vmatprep.subr.mxu0 0.0
    %1698 = vmatpush1.msra.mxu0 0.0
    %1699 = vmatprep.subr.mxu0 0.0
    %1700 = vmatpush1.msra.mxu0 0.0
    %1701 = vmatprep.subr.mxu0 0.0
    %1702 = vmatpush1.msra.mxu0 0.0
    %1703 = vmatprep.subr.mxu0 0.0
    %1704 = vmatpush1.msra.mxu0 0.0
    %1705 = vmatprep.subr.mxu0 0.0
    %1706 = vmatpush1.msra.mxu0 0.0
    %1707 = vmatprep.subr.mxu0 0.0
    %1708 = vmatpush1.msra.mxu0 0.0
    %1709 = vmatprep.subr.mxu0 0.0
    %1710 = vmatpush1.msra.mxu0 0.0
    %1711 = vmatprep.subr.mxu0 0.0
    %1712 = vmatpush1.msra.mxu0 0.0
    %1713 = vmatprep.subr.mxu0 0.0
    %1714 = vmatpush1.msra.mxu0 0.0
    %1715 = vmatprep.subr.mxu0 0.0
    %1716 = vmatpush1.msra.mxu0 0.0
    %1717 = vmatprep.subr.mxu0 0.0
    %1718 = vmatpush1.msra.mxu0 0.0
    %1719 = vmatprep.subr.mxu0 0.0
    %1720 = vmatpush1.msra.mxu0 0.0
    %1721 = vmatprep.subr.mxu0 0.0
    %1722 = vmatpush1.msra.mxu0 0.0
    %1723 = vmatprep.subr.mxu0 0.0
    %1724 = vmatpush1.msra.mxu0 0.0
    %1725 = vmatprep.subr.mxu0 0.0
    %1726 = vmatpush1.msra.mxu0 0.0
    %1727 = vmatprep.subr.mxu0 0.0
    %1728 = vmatpush1.msra.mxu0 0.0
    %1729 = vmatprep.subr.mxu0 0.0
    %1730 = vmatpush1.msra.mxu0 0.0
    %1731 = vmatprep.subr.mxu0 0.0
    %1732 = vmatpush1.msra.mxu0 0.0
    %1733 = vmatprep.mubr.f32.mxu0 0.0
    %1734 = vmatmul.mubr.f32.gmra.mrb[0].mxu0 %v1667
    %v1735 = vpop.f32.mrb[0].mxu0
    %v1736 = vadd.f32 0.0, %v1735
    %v1737 = vpop.f32.mrb[0].mxu0
    %1738 = vdwg.mxu0
    %1740 = vrot.lane.b32.xlu0 %v1578, 32
    %v1741 = vpop.permute.xlu0 %1740
    %1744 = vrot.lane.b32.xlu0 %v1657, 64
    %v1745 = vpop.permute.xlu0 %1744
    %1748 = vrot.lane.b32.xlu0 %v1736, 96
    %v1749 = vpop.permute.xlu0 %1748
    %v1751 = vsel %vm336, %v1497, %v1741
    %v1752 = vsel %vm1423, %v1751, %v1745
    %v1753 = vsel %vm1425, %v1752, %v1749
    %v1754 = vld [vmem:[#allocation10] sm:$0xff]
    %v1755 = vld [vmem:[#allocation10 + $0x8] sm:$0xff]
    %v1756 = vld [vmem:[#allocation10 + $0x10] sm:$0xff]
    %v1757 = vld [vmem:[#allocation10 + $0x18] sm:$0xff]
    %v1758 = vld [vmem:[#allocation10 + $0x20] sm:$0xff]
    %v1759 = vld [vmem:[#allocation10 + $0x28] sm:$0xff]
    %v1760 = vld [vmem:[#allocation10 + $0x30] sm:$0xff]
    %v1761 = vld [vmem:[#allocation10 + $0x38] sm:$0xff]
    %v1762 = vld [vmem:[#allocation10 + $0x40] sm:$0xff]
    %v1763 = vld [vmem:[#allocation10 + $0x48] sm:$0xff]
    %v1764 = vld [vmem:[#allocation10 + $0x50] sm:$0xff]
    %v1765 = vld [vmem:[#allocation10 + $0x58] sm:$0xff]
    %v1766 = vld [vmem:[#allocation10 + $0x60] sm:$0xff]
    %v1767 = vld [vmem:[#allocation10 + $0x68] sm:$0xff]
    %v1768 = vld [vmem:[#allocation10 + $0x70] sm:$0xff]
    %v1769 = vld [vmem:[#allocation10 + $0x78] sm:$0xff]
    %1770 = vmatprep.subr.mxu0 0.0
    %1771 = vmatpush1.msra.mxu0 %v1754
    %1772 = vmatprep.subr.mxu0 0.0
    %1773 = vmatpush1.msra.mxu0 %v1755
    %1774 = vmatprep.subr.mxu0 0.0
    %1775 = vmatpush1.msra.mxu0 %v1756
    %1776 = vmatprep.subr.mxu0 0.0
    %1777 = vmatpush1.msra.mxu0 %v1757
    %1778 = vmatprep.subr.mxu0 0.0
    %1779 = vmatpush1.msra.mxu0 %v1758
    %1780 = vmatprep.subr.mxu0 0.0
    %1781 = vmatpush1.msra.mxu0 %v1759
    %1782 = vmatprep.subr.mxu0 0.0
    %1783 = vmatpush1.msra.mxu0 %v1760
    %1784 = vmatprep.subr.mxu0 0.0
    %1785 = vmatpush1.msra.mxu0 %v1761
    %1786 = vmatprep.subr.mxu0 0.0
    %1787 = vmatpush1.msra.mxu0 %v1762
    %1788 = vmatprep.subr.mxu0 0.0
    %1789 = vmatpush1.msra.mxu0 %v1763
    %1790 = vmatprep.subr.mxu0 0.0
    %1791 = vmatpush1.msra.mxu0 %v1764
    %1792 = vmatprep.subr.mxu0 0.0
    %1793 = vmatpush1.msra.mxu0 %v1765
    %1794 = vmatprep.subr.mxu0 0.0
    %1795 = vmatpush1.msra.mxu0 %v1766
    %1796 = vmatprep.subr.mxu0 0.0
    %1797 = vmatpush1.msra.mxu0 %v1767
    %1798 = vmatprep.subr.mxu0 0.0
    %1799 = vmatpush1.msra.mxu0 %v1768
    %1800 = vmatprep.subr.mxu0 0.0
    %1801 = vmatpush1.msra.mxu0 %v1769
    %1802 = vmatprep.subr.mxu0 0.0
    %1803 = vmatpush1.msra.mxu0 0.0
    %1804 = vmatprep.subr.mxu0 0.0
    %1805 = vmatpush1.msra.mxu0 0.0
    %1806 = vmatprep.subr.mxu0 0.0
    %1807 = vmatpush1.msra.mxu0 0.0
    %1808 = vmatprep.subr.mxu0 0.0
    %1809 = vmatpush1.msra.mxu0 0.0
    %1810 = vmatprep.subr.mxu0 0.0
    %1811 = vmatpush1.msra.mxu0 0.0
    %1812 = vmatprep.subr.mxu0 0.0
    %1813 = vmatpush1.msra.mxu0 0.0
    %1814 = vmatprep.subr.mxu0 0.0
    %1815 = vmatpush1.msra.mxu0 0.0
    %1816 = vmatprep.subr.mxu0 0.0
    %1817 = vmatpush1.msra.mxu0 0.0
    %1818 = vmatprep.subr.mxu0 0.0
    %1819 = vmatpush1.msra.mxu0 0.0
    %1820 = vmatprep.subr.mxu0 0.0
    %1821 = vmatpush1.msra.mxu0 0.0
    %1822 = vmatprep.subr.mxu0 0.0
    %1823 = vmatpush1.msra.mxu0 0.0
    %1824 = vmatprep.subr.mxu0 0.0
    %1825 = vmatpush1.msra.mxu0 0.0
    %1826 = vmatprep.subr.mxu0 0.0
    %1827 = vmatpush1.msra.mxu0 0.0
    %1828 = vmatprep.subr.mxu0 0.0
    %1829 = vmatpush1.msra.mxu0 0.0
    %1830 = vmatprep.subr.mxu0 0.0
    %1831 = vmatpush1.msra.mxu0 0.0
    %1832 = vmatprep.subr.mxu0 0.0
    %1833 = vmatpush1.msra.mxu0 0.0
    %1834 = vmatprep.mubr.f32.mxu0 0.0
    %1835 = vmatmul.mubr.f32.gmra.mrb[0].mxu0 %v1426
    %v1836 = vpop.f32.mrb[0].mxu0
    %v1837 = vadd.f32 0.0, %v1836
    %v1838 = vpop.f32.mrb[0].mxu0
    %1839 = vmatprep.mubr.f32.mxu0 0.0
    %1840 = vmatmul.mubr.f32.gmra.mrb[0].mxu0 %v1753
    %v1841 = vpop.f32.mrb[0].mxu0
    %v1842 = vadd.f32 0.0, %v1841
    %v1843 = vpop.f32.mrb[0].mxu0
    %1844 = vdwg.mxu0
    %v1845 = vadd.f32 %v102, %v1837
    %v1846 = vadd.f32 %v103, %v1842
    %v1847 = vlaneseq
    %v1848 = vshrl.u32 %v1847, 7
    %v1849 = vsub.s32 0, %v1848
    %v1850 = vrot.slane %v99, %v1849
    %v1851 = vadd.f32 %v1845, %v1850
    %v1852 = vadd.f32 %v1846, %v1850
    %1853 = vadd.xlane.f32.xlu0 %v1851
    %v1854 = vpop.xlane.xlu0 %1853
    %1855 = vadd.xlane.f32.xlu0 %v1852
    %v1856 = vpop.xlane.xlu0 %1855
    %v1857 = vrcp.pop 128.0
    %v1858 = vmul.f32 %v1854, %v1857
    %v1859 = vmul.f32 %v1856, %v1857
    %v1860 = vsub.f32 %v1851, %v1858
    %v1861 = vsub.f32 %v1852, %v1859
    %v1862 = vmul.f32 %v1860, %v1860
    %v1863 = vmul.f32 %v1861, %v1861
    %1864 = vadd.xlane.f32.xlu0 %v1862
    %v1865 = vpop.xlane.xlu0 %1864
    %1866 = vadd.xlane.f32.xlu0 %v1863
    %v1867 = vpop.xlane.xlu0 %1866
    %v1868 = vmul.f32 %v1865, %v1857
    %v1869 = vmul.f32 %v1867, %v1857
    %v1870 = vadd.f32 %v1868, 1e-05
    %v1871 = vadd.f32 %v1869, 1e-05
    %v1872 = vrsqrt.pop %v1870
    %v1873 = vrsqrt.pop %v1871
    %v1874 = vmul.f32 %v1860, %v1872
    %v1875 = vmul.f32 %v1861, %v1873
    %v1876 = vlaneseq
    %v1877 = vshrl.u32 %v1876, 7
    %v1878 = vsub.s32 0, %v1877
    %v1879 = vrot.slane %v100, %v1878
    %v1880 = vmul.f32 %v1874, %v1879
    %v1881 = vmul.f32 %v1875, %v1879
    %v1882 = vlaneseq
    %v1883 = vshrl.u32 %v1882, 7
    %v1884 = vsub.s32 0, %v1883
    %v1885 = vrot.slane %v101, %v1884
    %v1886 = vadd.f32 %v1880, %v1885
    %v1887 = vadd.f32 %v1881, %v1885
    %1888 = vst [vmem:[#allocation11] sm:$0xff] %v1886
    %1889 = vst [vmem:[#allocation11 + $0x8] sm:$0xff] %v1887
    // Predicated region
    $region54: #{cross_attention_block.1} parent=1 // pred_check
      _
    $region55: #{cross_attention_block.1} parent=1 // pred_check_branch
      %1891 = sbr.rel (0) target = $region57
    $region56: #{cross_attention_block.1} parent=1 // pred_region
      %s1893 = ssub.s32 256, 256
      %1894 = vsyncadd [#allocation4], %s1893
      %s1895 = sshll.u32 [#allocation11], 4
      %s1896 = int_to_ptr.vmem [resolvable:$true] %s1895
      %1901 = dma.vmem_to_hbm [thread:$0]  %s1896, 256, %s8, [#allocation4], 128, 128, 8
    $region57: #{cross_attention_block.1} parent=1 // pred_fallthru
      _
    // Predicated region
    $region58: #{cross_attention_block.1} parent=1 // pred_check
      _
    $region59: #{cross_attention_block.1} parent=1 // pred_check_branch
      %1903 = sbr.rel (0) target = $region61
    $region60: #{cross_attention_block.1} parent=1 // pred_region
      %1904 = dma.done [#allocation4], 256
    $region61: #{cross_attention_block.1} parent=1 // pred_fallthru
      _
    %1905 = vsyncpa [#allocation3], 1
    %1906 = vsyncpa [#allocation6], 1
    %1907 = vsyncpa [#allocation9], 1
    %1908 = vsyncpa [#allocation4], 1

</llo_original>
